<compile_context>
chip_gen: v7x
topology: tpu7x:2x2x1
jax: 0.10.0
libtpu: 0.0.40
codegen_flags: <defaults>
</compile_context>

<pallas_src>
import math
from functools import partial

import jax
import jax.numpy as jnp
from jax import lax
from jax.experimental import pallas as pl
from jax.experimental.pallas import tpu as pltpu


def decoder_layer_kernel(x_ref, cross_ref, w1_ref, b1_ref, w2_ref, b2_ref,
                         wp_ref, bp_ref, ox_ref, ot_ref, *, scale, kernel_size):
    bt, L, D = x_ref.shape
    btl = bt * L
    p = (kernel_size - 1) // 2

    x = x_ref[...].astype(jnp.float32)          # (bt, L, D)
    cross = cross_ref[...].astype(jnp.float32)  # (bt, S, D)

    # Within-batch sequence position of every merged row.  Hoisted once and
    # reused by all three decompositions and the circular-projection masks.
    pos = lax.broadcasted_iota(jnp.int32, (btl, 1), 0) % L
    fwd_masks = [pos + o < L for o in range(1, p + 1)]   # row t has a valid t+o
    bwd_masks = [pos - o >= 0 for o in range(1, p + 1)]  # row t has a valid t-o

    def attention(q, kv):
        # softmax(q kv^T / sqrt(D)) kv.  Scale folded into q, QK^T contracts on
        # the feature axis (no transpose).  bf16 MXU operands / f32 accumulate;
        # all element-wise math stays f32 (v5e has no bf16 VPU/EUP).
        qs = (q * scale).astype(jnp.bfloat16)
        kvb = kv.astype(jnp.bfloat16)
        s = jnp.einsum('bqd,bkd->bqk', qs, kvb, preferred_element_type=jnp.float32)
        m = jnp.max(s, axis=-1, keepdims=True)
        e = jnp.exp(s - m)
        l = jnp.sum(e, axis=-1, keepdims=True)
        o = jnp.einsum('bqk,bkd->bqd', e.astype(jnp.bfloat16), kvb,
                       preferred_element_type=jnp.float32)
        return o * pl.reciprocal(l, approx=False)   # exact, matches torch softmax

    def series_decomp(v):
        # nn.AvgPool1d(kernel_size, stride=1, padding=(k-1)//2): zero padding,
        # count_include_pad=True.  2*(k-1)/2 static XLU rolls of the merged
        # (bt*L, D) block + boundary masks.  Roll wrap-around across batch
        # boundaries lands exactly on rows the masks zero out, so merging the
        # batch rows stays exact.
        acc = v
        for i, o in enumerate(range(1, p + 1)):
            fwd = pltpu.roll(v, shift=(-o) % btl, axis=0)   # v[t + o]
            bwd = pltpu.roll(v, shift=o % btl, axis=0)      # v[t - o]
            acc = acc + jnp.where(fwd_masks[i], fwd, 0.0)
            acc = acc + jnp.where(bwd_masks[i], bwd, 0.0)
        mean = acc * (1.0 / kernel_size)
        return v - mean, mean

    # --- self attention + residual, decomp1
    x1 = (x + attention(x, x)).reshape(btl, D)
    s1, trend1 = series_decomp(x1)

    # --- cross attention + residual, decomp2
    x2 = s1.reshape(bt, L, D)
    x2 = (x2 + attention(x2, cross)).reshape(btl, D)
    s2, trend2 = series_decomp(x2)

    # --- position-wise FFN: Conv1d(k=1) -> relu -> Conv1d(k=1), then decomp3.
    # Batch rows merged into the MXU M dimension (bt*L rows per matmul).
    y = jnp.dot(s2.astype(jnp.bfloat16), w1_ref[...],
                preferred_element_type=jnp.float32) + b1_ref[...]
    y = jnp.maximum(y, 0.0)                                   # activation='relu'
    y = jnp.dot(y.astype(jnp.bfloat16), w2_ref[...],
                preferred_element_type=jnp.float32) + b2_ref[...]
    s3, trend3 = series_decomp(s2 + y)

    ox_ref[...] = s3.reshape(bt, L, D).astype(ox_ref.dtype)

    # --- trend projection: Conv1d(d_model, c_out, k=3, padding=1, circular).
    # +/-1 circular shifts via XLU rolls (per-batch wrap fixed on boundary rows
    # by a second roll + select), fused into one (bt*L, 3D) @ (3D, C) matmul.
    trend = trend1 + trend2 + trend3                           # (bt*L, D)
    left = jnp.where(pos >= 1,
                     pltpu.roll(trend, shift=1 % btl, axis=0),
                     pltpu.roll(trend, shift=(1 - L) % btl, axis=0))   # trend[(t-1) mod L]
    right = jnp.where(pos <= L - 2,
                      pltpu.roll(trend, shift=(-1) % btl, axis=0),
                      pltpu.roll(trend, shift=(L - 1) % btl, axis=0))  # trend[(t+1) mod L]
    taps = jnp.concatenate([left, trend, right], axis=1).astype(jnp.bfloat16)
    proj = jnp.dot(taps, wp_ref[...], preferred_element_type=jnp.float32) + bp_ref[...]
    ot_ref[...] = proj.reshape(bt, L, ot_ref.shape[-1]).astype(ot_ref.dtype)


def _pick_block_b(B, L, target_rows=256):
    """Merge batches into the MXU M dimension, keep grid >= 2 for v7x's 2 TCs,
    and only merge when L % 8 == 0 so in-kernel reshapes are layout-preserving."""
    if L % 8 != 0:
        return 1
    best = 1
    for bt in range(1, B + 1):
        if B % bt == 0 and bt * L <= target_rows:
            best = bt
    if B // best < 2 and B > 1:
        for bt in range(best - 1, 0, -1):
            if B % bt == 0 and B // bt >= 2:
                best = bt
                break
    return best


def decoder_layer(x, cross, w1, b1, w2, b2, wp, bp, *, moving_avg, block_b=None):
    B, L, D = x.shape
    S = cross.shape[1]
    F = w1.shape[1]
    C = wp.shape[-1]
    assert moving_avg % 2 == 1, "AvgPool1d moving_avg kernel must be odd"
    assert wp.shape == (3, D, C)

    if block_b is None:
        block_b = _pick_block_b(B, L)
    assert B % block_b == 0

    # bf16 MXU operands at the call boundary; biases stay f32 (post-accumulate).
    w1b = w1.astype(jnp.bfloat16)
    w2b = w2.astype(jnp.bfloat16)
    wpb = wp.reshape(3 * D, C).astype(jnp.bfloat16)   # 3 taps fused along K

    # Scoped-VMEM budget: double-buffered I/O blocks + weights + rough in-kernel
    # temporaries; floored at 32 MiB, capped below v7x's 64 MiB physical VMEM.
    io_bytes = 2 * 4 * block_b * (L * D + S * D + L * D + L * C)
    wt_bytes = 2 * (2 * (D * F + F * D + 3 * D * C) + 4 * (F + D + C))
    tmp_bytes = 4 * block_b * (2 * L * S + 12 * L * D + L * F + 2 * L * C + 2 * S * D)
    vmem_limit = int(min(max(io_bytes + wt_bytes + tmp_bytes, 32 << 20), 48 << 20))

    kern = partial(decoder_layer_kernel,
                   scale=1.0 / math.sqrt(D), kernel_size=moving_avg)

    return pl.pallas_call(
        kern,
        out_shape=(jax.ShapeDtypeStruct((B, L, D), x.dtype),   # seasonal (x) out
                   jax.ShapeDtypeStruct((B, L, C), x.dtype)),  # projected trend
        grid_spec=pltpu.PrefetchScalarGridSpec(
            num_scalar_prefetch=0,
            grid=(B // block_b,),
            in_specs=[
                pl.BlockSpec((block_b, L, D), lambda b: (b, 0, 0)),   # x
                pl.BlockSpec((block_b, S, D), lambda b: (b, 0, 0)),   # cross
                # TODO(synk): pipeline_mode=pl.Buffered(1) on the constant
                #             weight specs would halve their VMEM on v7x; kept
                #             at default double-buffering for lowering safety.
                pl.BlockSpec((D, F), lambda b: (0, 0)),               # conv1 weight
                pl.BlockSpec((1, F), lambda b: (0, 0)),               # conv1 bias
                pl.BlockSpec((F, D), lambda b: (0, 0)),               # conv2 weight
                pl.BlockSpec((1, D), lambda b: (0, 0)),               # conv2 bias
                pl.BlockSpec((3 * D, C), lambda b: (0, 0)),           # projection taps (fused)
                pl.BlockSpec((1, C), lambda b: (0, 0)),               # projection bias
            ],
            out_specs=[
                pl.BlockSpec((block_b, L, D), lambda b: (b, 0, 0)),
                pl.BlockSpec((block_b, L, C), lambda b: (b, 0, 0)),
            ],
        ),
        compiler_params=pltpu.CompilerParams(
            dimension_semantics=("parallel",),
            vmem_limit_bytes=vmem_limit),
    )(x, cross, w1b, b1, w2b, b2, wpb, bp)


if __name__ == "__main__":
    # Small, lane-dense shapes: batch=2, dec_len=16, enc_len=24,
    # d_model=128, d_ff=128, c_out=128, moving_avg=5 (odd, as in Autoformer).
    B, L, S, D, F, C, MA = 2, 16, 24, 128, 128, 128, 5

    key = jax.random.PRNGKey(0)
    ks = jax.random.split(key, 8)
    x = jax.random.normal(ks[0], (B, L, D), jnp.float32)
    cross = jax.random.normal(ks[1], (B, S, D), jnp.float32)
    # conv1: nn.Conv1d(d_model, d_ff, 1) -> torch weight (F, D, 1); W1 = weight[:, :, 0].T
    w1 = jax.random.normal(ks[2], (D, F), jnp.float32) * 0.1
    b1 = jax.random.normal(ks[3], (1, F), jnp.float32) * 0.1
    # conv2: nn.Conv1d(d_ff, d_model, 1) -> (F, D)
    w2 = jax.random.normal(ks[4], (F, D), jnp.float32) * 0.1
    b2 = jax.random.normal(ks[5], (1, D), jnp.float32) * 0.1
    # projection: nn.Conv1d(d_model, c_out, 3, padding=1, padding_mode='circular')
    # wp[j] = torch weight[:, :, j].T, shape (D, C) per tap.
    wp = jax.random.normal(ks[6], (3, D, C), jnp.float32) * 0.1
    bp = jax.random.normal(ks[7], (1, C), jnp.float32) * 0.1

    out_x, out_trend = decoder_layer(x, cross, w1, b1, w2, b2, wp, bp,
                                     moving_avg=MA)
    jax.block_until_ready((out_x, out_trend))
    assert out_x.shape == (B, L, D) and out_trend.shape == (B, L, C)
    print("KERNEL_OK")
</pallas_src>

<mosaic_0001>
module attributes {stable_mosaic.version = 11 : i64} {
  func.func @decoder_layer_kernel(%arg0: i32, %arg1: memref<1x16x128xf32, #tpu.memory_space<vmem>>, %arg2: memref<1x24x128xf32, #tpu.memory_space<vmem>>, %arg3: memref<128x128xbf16, #tpu.memory_space<vmem>>, %arg4: memref<1x128xf32, #tpu.memory_space<vmem>>, %arg5: memref<128x128xbf16, #tpu.memory_space<vmem>>, %arg6: memref<1x128xf32, #tpu.memory_space<vmem>>, %arg7: memref<384x128xbf16, #tpu.memory_space<vmem>>, %arg8: memref<1x128xf32, #tpu.memory_space<vmem>>, %arg9: memref<1x16x128xf32, #tpu.memory_space<vmem>>, %arg10: memref<1x16x128xf32, #tpu.memory_space<vmem>>) attributes {dimension_semantics = [#tpu.dimension_semantics<parallel>], iteration_bounds = array<i64: 2>, scalar_prefetch = 0 : i64, scratch_operands = 0 : i64, tpu.core_type = #tpu.core_type<tc>, window_params = [{transform_indices = @transform_0, window_bounds = array<i64: 1, 16, 128>}, {transform_indices = @transform_1, window_bounds = array<i64: 1, 24, 128>}, {pipeline_mode = #tpu.pipeline_mode<synchronous>, transform_indices = @transform_2, window_bounds = array<i64: 128, 128>}, {pipeline_mode = #tpu.pipeline_mode<synchronous>, transform_indices = @transform_3, window_bounds = array<i64: 1, 128>}, {pipeline_mode = #tpu.pipeline_mode<synchronous>, transform_indices = @transform_4, window_bounds = array<i64: 128, 128>}, {pipeline_mode = #tpu.pipeline_mode<synchronous>, transform_indices = @transform_5, window_bounds = array<i64: 1, 128>}, {pipeline_mode = #tpu.pipeline_mode<synchronous>, transform_indices = @transform_6, window_bounds = array<i64: 384, 128>}, {pipeline_mode = #tpu.pipeline_mode<synchronous>, transform_indices = @transform_7, window_bounds = array<i64: 1, 128>}, {transform_indices = @transform_8, window_bounds = array<i64: 1, 16, 128>}, {transform_indices = @transform_9, window_bounds = array<i64: 1, 16, 128>}]} {
    %c0 = arith.constant 0 : index
    %c0_0 = arith.constant 0 : index
    %c0_1 = arith.constant 0 : index
    %0 = vector.load %arg1[%c0, %c0_0, %c0_1] : memref<1x16x128xf32, #tpu.memory_space<vmem>>, vector<1x16x128xf32>
    %c0_2 = arith.constant 0 : index
    %c0_3 = arith.constant 0 : index
    %c0_4 = arith.constant 0 : index
    %1 = vector.load %arg2[%c0_2, %c0_3, %c0_4] : memref<1x24x128xf32, #tpu.memory_space<vmem>>, vector<1x24x128xf32>
    %2 = tpu.iota {dimensions = array<i32: 0>} : vector<16x1xi32>
    %c16_i32 = arith.constant 16 : i32
    %c0_i32 = arith.constant 0 : i32
    %3 = arith.cmpi eq, %c16_i32, %c0_i32 : i32
    %c1_i32 = arith.constant 1 : i32
    %4 = arith.select %3, %c1_i32, %c16_i32 : i32
    %5 = vector.broadcast %4 : i32 to vector<16x1xi32>
    %6 = arith.remsi %2, %5 : vector<16x1xi32>
    %c0_i32_5 = arith.constant 0 : i32
    %7 = vector.broadcast %c0_i32_5 : i32 to vector<16x1xi32>
    %8 = arith.cmpi ne, %6, %7 : vector<16x1xi32>
    %c0_i32_6 = arith.constant 0 : i32
    %9 = vector.broadcast %c0_i32_6 : i32 to vector<16x1xi32>
    %10 = arith.cmpi slt, %6, %9 : vector<16x1xi32>
    %c0_i32_7 = arith.constant 0 : i32
    %11 = arith.cmpi slt, %4, %c0_i32_7 : i32
    %12 = vector.broadcast %11 : i1 to vector<16x1xi1>
    %13 = vector.broadcast %12 : vector<16x1xi1> to vector<16x1xi1>
    %14 = arith.xori %10, %13 : vector<16x1xi1>
    %15 = arith.andi %14, %8 : vector<16x1xi1>
    %16 = vector.broadcast %4 : i32 to vector<16x1xi32>
    %17 = arith.addi %6, %16 : vector<16x1xi32>
    %18 = arith.select %15, %17, %6 : vector<16x1xi1>, vector<16x1xi32>
    %c1_i32_8 = arith.constant 1 : i32
    %19 = vector.broadcast %c1_i32_8 : i32 to vector<16x1xi32>
    %20 = arith.addi %18, %19 : vector<16x1xi32>
    %c16_i32_9 = arith.constant 16 : i32
    %21 = vector.broadcast %c16_i32_9 : i32 to vector<16x1xi32>
    %22 = arith.cmpi slt, %20, %21 : vector<16x1xi32>
    %c2_i32 = arith.constant 2 : i32
    %23 = vector.broadcast %c2_i32 : i32 to vector<16x1xi32>
    %24 = arith.addi %18, %23 : vector<16x1xi32>
    %c16_i32_10 = arith.constant 16 : i32
    %25 = vector.broadcast %c16_i32_10 : i32 to vector<16x1xi32>
    %26 = arith.cmpi slt, %24, %25 : vector<16x1xi32>
    %c1_i32_11 = arith.constant 1 : i32
    %27 = vector.broadcast %c1_i32_11 : i32 to vector<16x1xi32>
    %28 = arith.subi %18, %27 : vector<16x1xi32>
    %c0_i32_12 = arith.constant 0 : i32
    %29 = vector.broadcast %c0_i32_12 : i32 to vector<16x1xi32>
    %30 = arith.cmpi sge, %28, %29 : vector<16x1xi32>
    %c2_i32_13 = arith.constant 2 : i32
    %31 = vector.broadcast %c2_i32_13 : i32 to vector<16x1xi32>
    %32 = arith.subi %18, %31 : vector<16x1xi32>
    %c0_i32_14 = arith.constant 0 : i32
    %33 = vector.broadcast %c0_i32_14 : i32 to vector<16x1xi32>
    %34 = arith.cmpi sge, %32, %33 : vector<16x1xi32>
    %cst = arith.constant 0.0883883461 : f32
    %35 = vector.broadcast %cst : f32 to vector<1x16x128xf32>
    %36 = arith.mulf %0, %35 : vector<1x16x128xf32>
    %37 = arith.truncf %36 : vector<1x16x128xf32> to vector<1x16x128xbf16>
    %38 = arith.truncf %0 : vector<1x16x128xf32> to vector<1x16x128xbf16>
    "tpu.trace_start"() <{level = 10 : i32, message = "bqd,bkd->bqk"}> : () -> ()
    %cst_15 = arith.constant dense<0.000000e+00> : vector<1x16x16xf32>
    %39 = tpu.matmul %37, %38, %cst_15 {dimension_numbers = #tpu.dot_dimension_numbers<[2], [2], [1], [1], [0, 0, 0, 1, 1, 1], [0], [0]>} : vector<1x16x128xbf16>, vector<1x16x128xbf16>, vector<1x16x16xf32> -> vector<1x16x16xf32>
    "tpu.trace_stop"() : () -> ()
    %cst_16 = arith.constant dense<0xFF800000> : vector<1x16xf32>
    %40 = vector.multi_reduction <maximumf>, %39, %cst_16 [2] : vector<1x16x16xf32> to vector<1x16xf32>
    %41 = vector.shape_cast %40 : vector<1x16xf32> to vector<1x16x1xf32>
    %42 = vector.broadcast %41 : vector<1x16x1xf32> to vector<1x16x16xf32>
    %43 = arith.subf %39, %42 : vector<1x16x16xf32>
    %44 = math.exp %43 : vector<1x16x16xf32>
    %cst_17 = arith.constant dense<0.000000e+00> : vector<1x16xf32>
    %45 = vector.multi_reduction <add>, %44, %cst_17 [2] : vector<1x16x16xf32> to vector<1x16xf32>
    %46 = vector.shape_cast %45 : vector<1x16xf32> to vector<1x16x1xf32>
    %47 = arith.truncf %44 : vector<1x16x16xf32> to vector<1x16x16xbf16>
    "tpu.trace_start"() <{level = 10 : i32, message = "bqk,bkd->bqd"}> : () -> ()
    %cst_18 = arith.constant dense<0.000000e+00> : vector<1x16x128xf32>
    %48 = tpu.matmul %47, %38, %cst_18 {dimension_numbers = #tpu.dot_dimension_numbers<[2], [1], [1], [2], [0, 0, 0, 1, 1, 2], [0], [0]>} : vector<1x16x16xbf16>, vector<1x16x128xbf16>, vector<1x16x128xf32> -> vector<1x16x128xf32>
    "tpu.trace_stop"() : () -> ()
    %49 = tpu.reciprocal %46 : vector<1x16x1xf32> -> vector<1x16x1xf32>
    %50 = vector.broadcast %49 : vector<1x16x1xf32> to vector<1x16x128xf32>
    %51 = arith.mulf %48, %50 : vector<1x16x128xf32>
    %52 = arith.addf %0, %51 : vector<1x16x128xf32>
    %53 = vector.shape_cast %52 : vector<1x16x128xf32> to vector<16x128xf32>
    %c15_i32 = arith.constant 15 : i32
    %54 = tpu.dynamic_rotate %53 by %c15_i32 dim 0 : vector<16x128xf32>, i32 -> vector<16x128xf32>
    %c1_i32_19 = arith.constant 1 : i32
    %55 = tpu.dynamic_rotate %53 by %c1_i32_19 dim 0 : vector<16x128xf32>, i32 -> vector<16x128xf32>
    %cst_20 = arith.constant 0.000000e+00 : f32
    %56 = vector.shape_cast %22 : vector<16x1xi1> to vector<16x1xi1>
    %57 = vector.broadcast %56 : vector<16x1xi1> to vector<16x128xi1>
    %58 = vector.broadcast %cst_20 : f32 to vector<16x128xf32>
    %59 = arith.select %57, %54, %58 : vector<16x128xi1>, vector<16x128xf32>
    %60 = arith.addf %53, %59 : vector<16x128xf32>
    %cst_21 = arith.constant 0.000000e+00 : f32
    %61 = vector.shape_cast %30 : vector<16x1xi1> to vector<16x1xi1>
    %62 = vector.broadcast %61 : vector<16x1xi1> to vector<16x128xi1>
    %63 = vector.broadcast %cst_21 : f32 to vector<16x128xf32>
    %64 = arith.select %62, %55, %63 : vector<16x128xi1>, vector<16x128xf32>
    %65 = arith.addf %60, %64 : vector<16x128xf32>
    %c14_i32 = arith.constant 14 : i32
    %66 = tpu.dynamic_rotate %53 by %c14_i32 dim 0 : vector<16x128xf32>, i32 -> vector<16x128xf32>
    %c2_i32_22 = arith.constant 2 : i32
    %67 = tpu.dynamic_rotate %53 by %c2_i32_22 dim 0 : vector<16x128xf32>, i32 -> vector<16x128xf32>
    %cst_23 = arith.constant 0.000000e+00 : f32
    %68 = vector.shape_cast %26 : vector<16x1xi1> to vector<16x1xi1>
    %69 = vector.broadcast %68 : vector<16x1xi1> to vector<16x128xi1>
    %70 = vector.broadcast %cst_23 : f32 to vector<16x128xf32>
    %71 = arith.select %69, %66, %70 : vector<16x128xi1>, vector<16x128xf32>
    %72 = arith.addf %65, %71 : vector<16x128xf32>
    %cst_24 = arith.constant 0.000000e+00 : f32
    %73 = vector.shape_cast %34 : vector<16x1xi1> to vector<16x1xi1>
    %74 = vector.broadcast %73 : vector<16x1xi1> to vector<16x128xi1>
    %75 = vector.broadcast %cst_24 : f32 to vector<16x128xf32>
    %76 = arith.select %74, %67, %75 : vector<16x128xi1>, vector<16x128xf32>
    %77 = arith.addf %72, %76 : vector<16x128xf32>
    %cst_25 = arith.constant 2.000000e-01 : f32
    %78 = vector.broadcast %cst_25 : f32 to vector<16x128xf32>
    %79 = arith.mulf %77, %78 : vector<16x128xf32>
    %80 = arith.subf %53, %79 : vector<16x128xf32>
    %81 = vector.shape_cast %80 : vector<16x128xf32> to vector<1x16x128xf32>
    %cst_26 = arith.constant 0.0883883461 : f32
    %82 = vector.broadcast %cst_26 : f32 to vector<1x16x128xf32>
    %83 = arith.mulf %81, %82 : vector<1x16x128xf32>
    %84 = arith.truncf %83 : vector<1x16x128xf32> to vector<1x16x128xbf16>
    %85 = arith.truncf %1 : vector<1x24x128xf32> to vector<1x24x128xbf16>
    "tpu.trace_start"() <{level = 10 : i32, message = "bqd,bkd->bqk"}> : () -> ()
    %cst_27 = arith.constant dense<0.000000e+00> : vector<1x16x24xf32>
    %86 = tpu.matmul %84, %85, %cst_27 {dimension_numbers = #tpu.dot_dimension_numbers<[2], [2], [1], [1], [0, 0, 0, 1, 1, 1], [0], [0]>} : vector<1x16x128xbf16>, vector<1x24x128xbf16>, vector<1x16x24xf32> -> vector<1x16x24xf32>
    "tpu.trace_stop"() : () -> ()
    %cst_28 = arith.constant dense<0xFF800000> : vector<1x16xf32>
    %87 = vector.multi_reduction <maximumf>, %86, %cst_28 [2] : vector<1x16x24xf32> to vector<1x16xf32>
    %88 = vector.shape_cast %87 : vector<1x16xf32> to vector<1x16x1xf32>
    %89 = vector.broadcast %88 : vector<1x16x1xf32> to vector<1x16x24xf32>
    %90 = arith.subf %86, %89 : vector<1x16x24xf32>
    %91 = math.exp %90 : vector<1x16x24xf32>
    %cst_29 = arith.constant dense<0.000000e+00> : vector<1x16xf32>
    %92 = vector.multi_reduction <add>, %91, %cst_29 [2] : vector<1x16x24xf32> to vector<1x16xf32>
    %93 = vector.shape_cast %92 : vector<1x16xf32> to vector<1x16x1xf32>
    %94 = arith.truncf %91 : vector<1x16x24xf32> to vector<1x16x24xbf16>
    "tpu.trace_start"() <{level = 10 : i32, message = "bqk,bkd->bqd"}> : () -> ()
    %cst_30 = arith.constant dense<0.000000e+00> : vector<1x16x128xf32>
    %95 = tpu.matmul %94, %85, %cst_30 {dimension_numbers = #tpu.dot_dimension_numbers<[2], [1], [1], [2], [0, 0, 0, 1, 1, 2], [0], [0]>} : vector<1x16x24xbf16>, vector<1x24x128xbf16>, vector<1x16x128xf32> -> vector<1x16x128xf32>
    "tpu.trace_stop"() : () -> ()
    %96 = tpu.reciprocal %93 : vector<1x16x1xf32> -> vector<1x16x1xf32>
    %97 = vector.broadcast %96 : vector<1x16x1xf32> to vector<1x16x128xf32>
    %98 = arith.mulf %95, %97 : vector<1x16x128xf32>
    %99 = arith.addf %81, %98 : vector<1x16x128xf32>
    %100 = vector.shape_cast %99 : vector<1x16x128xf32> to vector<16x128xf32>
    %c15_i32_31 = arith.constant 15 : i32
    %101 = tpu.dynamic_rotate %100 by %c15_i32_31 dim 0 : vector<16x128xf32>, i32 -> vector<16x128xf32>
    %c1_i32_32 = arith.constant 1 : i32
    %102 = tpu.dynamic_rotate %100 by %c1_i32_32 dim 0 : vector<16x128xf32>, i32 -> vector<16x128xf32>
    %cst_33 = arith.constant 0.000000e+00 : f32
    %103 = vector.shape_cast %22 : vector<16x1xi1> to vector<16x1xi1>
    %104 = vector.broadcast %103 : vector<16x1xi1> to vector<16x128xi1>
    %105 = vector.broadcast %cst_33 : f32 to vector<16x128xf32>
    %106 = arith.select %104, %101, %105 : vector<16x128xi1>, vector<16x128xf32>
    %107 = arith.addf %100, %106 : vector<16x128xf32>
    %cst_34 = arith.constant 0.000000e+00 : f32
    %108 = vector.shape_cast %30 : vector<16x1xi1> to vector<16x1xi1>
    %109 = vector.broadcast %108 : vector<16x1xi1> to vector<16x128xi1>
    %110 = vector.broadcast %cst_34 : f32 to vector<16x128xf32>
    %111 = arith.select %109, %102, %110 : vector<16x128xi1>, vector<16x128xf32>
    %112 = arith.addf %107, %111 : vector<16x128xf32>
    %c14_i32_35 = arith.constant 14 : i32
    %113 = tpu.dynamic_rotate %100 by %c14_i32_35 dim 0 : vector<16x128xf32>, i32 -> vector<16x128xf32>
    %c2_i32_36 = arith.constant 2 : i32
    %114 = tpu.dynamic_rotate %100 by %c2_i32_36 dim 0 : vector<16x128xf32>, i32 -> vector<16x128xf32>
    %cst_37 = arith.constant 0.000000e+00 : f32
    %115 = vector.shape_cast %26 : vector<16x1xi1> to vector<16x1xi1>
    %116 = vector.broadcast %115 : vector<16x1xi1> to vector<16x128xi1>
    %117 = vector.broadcast %cst_37 : f32 to vector<16x128xf32>
    %118 = arith.select %116, %113, %117 : vector<16x128xi1>, vector<16x128xf32>
    %119 = arith.addf %112, %118 : vector<16x128xf32>
    %cst_38 = arith.constant 0.000000e+00 : f32
    %120 = vector.shape_cast %34 : vector<16x1xi1> to vector<16x1xi1>
    %121 = vector.broadcast %120 : vector<16x1xi1> to vector<16x128xi1>
    %122 = vector.broadcast %cst_38 : f32 to vector<16x128xf32>
    %123 = arith.select %121, %114, %122 : vector<16x128xi1>, vector<16x128xf32>
    %124 = arith.addf %119, %123 : vector<16x128xf32>
    %cst_39 = arith.constant 2.000000e-01 : f32
    %125 = vector.broadcast %cst_39 : f32 to vector<16x128xf32>
    %126 = arith.mulf %124, %125 : vector<16x128xf32>
    %127 = arith.subf %100, %126 : vector<16x128xf32>
    %128 = arith.truncf %127 : vector<16x128xf32> to vector<16x128xbf16>
    %c0_40 = arith.constant 0 : index
    %c0_41 = arith.constant 0 : index
    %129 = vector.load %arg3[%c0_40, %c0_41] : memref<128x128xbf16, #tpu.memory_space<vmem>>, vector<128x128xbf16>
    %cst_42 = arith.constant dense<0.000000e+00> : vector<16x128xf32>
    %130 = tpu.matmul %128, %129, %cst_42 {dimension_numbers = #tpu.dot_dimension_numbers<[1], [0], [0], [1], [0, 0, 1, 1], [], []>} : vector<16x128xbf16>, vector<128x128xbf16>, vector<16x128xf32> -> vector<16x128xf32>
    %c0_43 = arith.constant 0 : index
    %c0_44 = arith.constant 0 : index
    %131 = vector.load %arg4[%c0_43, %c0_44] : memref<1x128xf32, #tpu.memory_space<vmem>>, vector<1x128xf32>
    %132 = vector.broadcast %131 : vector<1x128xf32> to vector<16x128xf32>
    %133 = arith.addf %130, %132 : vector<16x128xf32>
    %cst_45 = arith.constant 0.000000e+00 : f32
    %134 = vector.broadcast %cst_45 : f32 to vector<16x128xf32>
    %135 = arith.maximumf %133, %134 : vector<16x128xf32>
    %136 = arith.truncf %135 : vector<16x128xf32> to vector<16x128xbf16>
    %c0_46 = arith.constant 0 : index
    %c0_47 = arith.constant 0 : index
    %137 = vector.load %arg5[%c0_46, %c0_47] : memref<128x128xbf16, #tpu.memory_space<vmem>>, vector<128x128xbf16>
    %cst_48 = arith.constant dense<0.000000e+00> : vector<16x128xf32>
    %138 = tpu.matmul %136, %137, %cst_48 {dimension_numbers = #tpu.dot_dimension_numbers<[1], [0], [0], [1], [0, 0, 1, 1], [], []>} : vector<16x128xbf16>, vector<128x128xbf16>, vector<16x128xf32> -> vector<16x128xf32>
    %c0_49 = arith.constant 0 : index
    %c0_50 = arith.constant 0 : index
    %139 = vector.load %arg6[%c0_49, %c0_50] : memref<1x128xf32, #tpu.memory_space<vmem>>, vector<1x128xf32>
    %140 = vector.broadcast %139 : vector<1x128xf32> to vector<16x128xf32>
    %141 = arith.addf %138, %140 : vector<16x128xf32>
    %142 = arith.addf %127, %141 : vector<16x128xf32>
    %c15_i32_51 = arith.constant 15 : i32
    %143 = tpu.dynamic_rotate %142 by %c15_i32_51 dim 0 : vector<16x128xf32>, i32 -> vector<16x128xf32>
    %c1_i32_52 = arith.constant 1 : i32
    %144 = tpu.dynamic_rotate %142 by %c1_i32_52 dim 0 : vector<16x128xf32>, i32 -> vector<16x128xf32>
    %cst_53 = arith.constant 0.000000e+00 : f32
    %145 = vector.shape_cast %22 : vector<16x1xi1> to vector<16x1xi1>
    %146 = vector.broadcast %145 : vector<16x1xi1> to vector<16x128xi1>
    %147 = vector.broadcast %cst_53 : f32 to vector<16x128xf32>
    %148 = arith.select %146, %143, %147 : vector<16x128xi1>, vector<16x128xf32>
    %149 = arith.addf %142, %148 : vector<16x128xf32>
    %cst_54 = arith.constant 0.000000e+00 : f32
    %150 = vector.shape_cast %30 : vector<16x1xi1> to vector<16x1xi1>
    %151 = vector.broadcast %150 : vector<16x1xi1> to vector<16x128xi1>
    %152 = vector.broadcast %cst_54 : f32 to vector<16x128xf32>
    %153 = arith.select %151, %144, %152 : vector<16x128xi1>, vector<16x128xf32>
    %154 = arith.addf %149, %153 : vector<16x128xf32>
    %c14_i32_55 = arith.constant 14 : i32
    %155 = tpu.dynamic_rotate %142 by %c14_i32_55 dim 0 : vector<16x128xf32>, i32 -> vector<16x128xf32>
    %c2_i32_56 = arith.constant 2 : i32
    %156 = tpu.dynamic_rotate %142 by %c2_i32_56 dim 0 : vector<16x128xf32>, i32 -> vector<16x128xf32>
    %cst_57 = arith.constant 0.000000e+00 : f32
    %157 = vector.shape_cast %26 : vector<16x1xi1> to vector<16x1xi1>
    %158 = vector.broadcast %157 : vector<16x1xi1> to vector<16x128xi1>
    %159 = vector.broadcast %cst_57 : f32 to vector<16x128xf32>
    %160 = arith.select %158, %155, %159 : vector<16x128xi1>, vector<16x128xf32>
    %161 = arith.addf %154, %160 : vector<16x128xf32>
    %cst_58 = arith.constant 0.000000e+00 : f32
    %162 = vector.shape_cast %34 : vector<16x1xi1> to vector<16x1xi1>
    %163 = vector.broadcast %162 : vector<16x1xi1> to vector<16x128xi1>
    %164 = vector.broadcast %cst_58 : f32 to vector<16x128xf32>
    %165 = arith.select %163, %156, %164 : vector<16x128xi1>, vector<16x128xf32>
    %166 = arith.addf %161, %165 : vector<16x128xf32>
    %cst_59 = arith.constant 2.000000e-01 : f32
    %167 = vector.broadcast %cst_59 : f32 to vector<16x128xf32>
    %168 = arith.mulf %166, %167 : vector<16x128xf32>
    %169 = arith.subf %142, %168 : vector<16x128xf32>
    %170 = vector.shape_cast %169 : vector<16x128xf32> to vector<1x16x128xf32>
    %c0_60 = arith.constant 0 : index
    %c0_61 = arith.constant 0 : index
    %c0_62 = arith.constant 0 : index
    %171 = vector.load %arg9[%c0_60, %c0_61, %c0_62] : memref<1x16x128xf32, #tpu.memory_space<vmem>>, vector<1x16x128xf32>
    tpu.vector_store %arg9[%c0_60, %c0_61, %c0_62], %170 {strides = array<i32>} : memref<1x16x128xf32, #tpu.memory_space<vmem>>, vector<1x16x128xf32>,
    %172 = arith.addf %79, %126 : vector<16x128xf32>
    %173 = arith.addf %172, %168 : vector<16x128xf32>
    %c1_i32_63 = arith.constant 1 : i32
    %174 = vector.broadcast %c1_i32_63 : i32 to vector<16x1xi32>
    %175 = arith.cmpi sge, %18, %174 : vector<16x1xi32>
    %c1_i32_64 = arith.constant 1 : i32
    %176 = tpu.dynamic_rotate %173 by %c1_i32_64 dim 0 : vector<16x128xf32>, i32 -> vector<16x128xf32>
    %c1_i32_65 = arith.constant 1 : i32
    %177 = tpu.dynamic_rotate %173 by %c1_i32_65 dim 0 : vector<16x128xf32>, i32 -> vector<16x128xf32>
    %178 = vector.shape_cast %175 : vector<16x1xi1> to vector<16x1xi1>
    %179 = vector.broadcast %178 : vector<16x1xi1> to vector<16x128xi1>
    %180 = arith.select %179, %176, %177 : vector<16x128xi1>, vector<16x128xf32>
    %c14_i32_66 = arith.constant 14 : i32
    %181 = vector.broadcast %c14_i32_66 : i32 to vector<16x1xi32>
    %182 = arith.cmpi sle, %18, %181 : vector<16x1xi32>
    %c15_i32_67 = arith.constant 15 : i32
    %183 = tpu.dynamic_rotate %173 by %c15_i32_67 dim 0 : vector<16x128xf32>, i32 -> vector<16x128xf32>
    %c15_i32_68 = arith.constant 15 : i32
    %184 = tpu.dynamic_rotate %173 by %c15_i32_68 dim 0 : vector<16x128xf32>, i32 -> vector<16x128xf32>
    %185 = vector.shape_cast %182 : vector<16x1xi1> to vector<16x1xi1>
    %186 = vector.broadcast %185 : vector<16x1xi1> to vector<16x128xi1>
    %187 = arith.select %186, %183, %184 : vector<16x128xi1>, vector<16x128xf32>
    %188 = tpu.concatenate %180, %173, %187 in 1 : vector<16x128xf32>, vector<16x128xf32>, vector<16x128xf32> -> vector<16x384xf32>
    %189 = arith.truncf %188 : vector<16x384xf32> to vector<16x384xbf16>
    %c0_69 = arith.constant 0 : index
    %c0_70 = arith.constant 0 : index
    %190 = vector.load %arg7[%c0_69, %c0_70] : memref<384x128xbf16, #tpu.memory_space<vmem>>, vector<384x128xbf16>
    %cst_71 = arith.constant dense<0.000000e+00> : vector<16x128xf32>
    %191 = tpu.matmul %189, %190, %cst_71 {dimension_numbers = #tpu.dot_dimension_numbers<[1], [0], [0], [1], [0, 0, 1, 1], [], []>} : vector<16x384xbf16>, vector<384x128xbf16>, vector<16x128xf32> -> vector<16x128xf32>
    %c0_72 = arith.constant 0 : index
    %c0_73 = arith.constant 0 : index
    %192 = vector.load %arg8[%c0_72, %c0_73] : memref<1x128xf32, #tpu.memory_space<vmem>>, vector<1x128xf32>
    %193 = vector.broadcast %192 : vector<1x128xf32> to vector<16x128xf32>
    %194 = arith.addf %191, %193 : vector<16x128xf32>
    %195 = vector.shape_cast %194 : vector<16x128xf32> to vector<1x16x128xf32>
    %c0_74 = arith.constant 0 : index
    %c0_75 = arith.constant 0 : index
    %c0_76 = arith.constant 0 : index
    %196 = vector.load %arg10[%c0_74, %c0_75, %c0_76] : memref<1x16x128xf32, #tpu.memory_space<vmem>>, vector<1x16x128xf32>
    tpu.vector_store %arg10[%c0_74, %c0_75, %c0_76], %195 {strides = array<i32>} : memref<1x16x128xf32, #tpu.memory_space<vmem>>, vector<1x16x128xf32>,
    return
  }
  func.func @transform_0(%arg0: i32) -> (i32, i32, i32) {
    %c0_i32 = arith.constant 0 : i32
    %c0_i32_0 = arith.constant 0 : i32
    %c0_i32_1 = arith.constant 0 : i32
    return %arg0, %c0_i32, %c0_i32_0 : i32, i32, i32
  }
  func.func @transform_1(%arg0: i32) -> (i32, i32, i32) {
    %c0_i32 = arith.constant 0 : i32
    %c0_i32_0 = arith.constant 0 : i32
    %c0_i32_1 = arith.constant 0 : i32
    return %arg0, %c0_i32, %c0_i32_0 : i32, i32, i32
  }
  func.func @transform_2(%arg0: i32) -> (i32, i32) {
    %c0_i32 = arith.constant 0 : i32
    %c0_i32_0 = arith.constant 0 : i32
    %c0_i32_1 = arith.constant 0 : i32
    return %c0_i32, %c0_i32_0 : i32, i32
  }
  func.func @transform_3(%arg0: i32) -> (i32, i32) {
    %c0_i32 = arith.constant 0 : i32
    %c0_i32_0 = arith.constant 0 : i32
    %c0_i32_1 = arith.constant 0 : i32
    return %c0_i32, %c0_i32_0 : i32, i32
  }
  func.func @transform_4(%arg0: i32) -> (i32, i32) {
    %c0_i32 = arith.constant 0 : i32
    %c0_i32_0 = arith.constant 0 : i32
    %c0_i32_1 = arith.constant 0 : i32
    return %c0_i32, %c0_i32_0 : i32, i32
  }
  func.func @transform_5(%arg0: i32) -> (i32, i32) {
    %c0_i32 = arith.constant 0 : i32
    %c0_i32_0 = arith.constant 0 : i32
    %c0_i32_1 = arith.constant 0 : i32
    return %c0_i32, %c0_i32_0 : i32, i32
  }
  func.func @transform_6(%arg0: i32) -> (i32, i32) {
    %c0_i32 = arith.constant 0 : i32
    %c0_i32_0 = arith.constant 0 : i32
    %c0_i32_1 = arith.constant 0 : i32
    return %c0_i32, %c0_i32_0 : i32, i32
  }
  func.func @transform_7(%arg0: i32) -> (i32, i32) {
    %c0_i32 = arith.constant 0 : i32
    %c0_i32_0 = arith.constant 0 : i32
    %c0_i32_1 = arith.constant 0 : i32
    return %c0_i32, %c0_i32_0 : i32, i32
  }
  func.func @transform_8(%arg0: i32) -> (i32, i32, i32) {
    %c0_i32 = arith.constant 0 : i32
    %c0_i32_0 = arith.constant 0 : i32
    %c0_i32_1 = arith.constant 0 : i32
    return %arg0, %c0_i32, %c0_i32_0 : i32, i32, i32
  }
  func.func @transform_9(%arg0: i32) -> (i32, i32, i32) {
    %c0_i32 = arith.constant 0 : i32
    %c0_i32_0 = arith.constant 0 : i32
    %c0_i32_1 = arith.constant 0 : i32
    return %arg0, %c0_i32, %c0_i32_0 : i32, i32, i32
  }
}

</mosaic_0001>

<llo_original>
// kernel: tpu_custom_call.1
$region0: #{tpu_custom_call.1}
  #allocation0 [shape = 'u32[]', space=smem, size = 0x4, offset = 0x4, fixed_abs, tag = 'smem constant byte address 0x4 - core index']
  #allocation1 [shape = 'u32[144,128]{1,0:T(1,128)}', space=vmem, size = 0x12000, scoped, tag = 'internal scratch']
  %s0 = inlined_call_operand.hbm [shape: f32[2,16,128], index: 0, kind: input, shape index: {}]
  %s1 = inlined_call_operand.hbm [shape: f32[2,24,128], index: 1, kind: input, shape index: {}]
  %s2 = inlined_call_operand.hbm [shape: bf16[128,128], index: 2, kind: input, shape index: {}]
  %s3 = inlined_call_operand.vmem [shape: f32[1,128], index: 3, kind: input, shape index: {}]
  %s4 = inlined_call_operand.hbm [shape: bf16[128,128], index: 4, kind: input, shape index: {}]
  %s5 = inlined_call_operand.vmem [shape: f32[1,128], index: 5, kind: input, shape index: {}]
  %s6 = inlined_call_operand.hbm [shape: bf16[384,128], index: 6, kind: input, shape index: {}]
  %s7 = inlined_call_operand.vmem [shape: f32[1,128], index: 7, kind: input, shape index: {}]
  %s8 = inlined_call_operand.hbm [shape: f32[2,16,128], index: 8, kind: output, shape index: {0}]
  %s9 = inlined_call_operand.hbm [shape: f32[2,16,128], index: 9, kind: output, shape index: {1}]
  %10 = xla_tuple %s8, %s9
  %s11 = sld [smem:[#allocation0]]
  $region93: #{tpu_custom_call.1} parent=0
    _
  %s13 = ssub.s32 1, %s11
  %s14 = scalar_select 0, %s13, %s11
  $region1: #{tpu_custom_call.1} parent=0
    #allocation2 [shape = 'u8[16384]{0}', space=vmem, size = 0x4000, scoped, tag = 'input window, operand 0']
    #allocation3 [shape = 's32[2]{0}', space=sflag, size = 0x8, scoped, tag = 'scoped memory for tpu_custom_call.1']
    #allocation4 [shape = 's32[2]{0}', space=sflag, size = 0x8, scoped, tag = 'scoped memory for tpu_custom_call.1']
    #allocation5 [shape = 'u8[24576]{0}', space=vmem, size = 0x6000, scoped, tag = 'input window, operand 1']
    #allocation6 [shape = 's32[2]{0}', space=sflag, size = 0x8, scoped, tag = 'scoped memory for tpu_custom_call.1']
    #allocation7 [shape = 'u8[32768]{0}', space=vmem, size = 0x8000, scoped, tag = 'input window, operand 2, single buffered']
    #allocation8 [shape = 'u8[32768]{0}', space=vmem, size = 0x8000, scoped, tag = 'input window, operand 4, single buffered']
    #allocation9 [shape = 's32[1]{0}', space=sflag, size = 0x4, scoped, tag = 'scoped memory for tpu_custom_call.1']
    #allocation10 [shape = 'u8[98304]{0}', space=vmem, size = 0x18000, scoped, tag = 'input window, operand 6, single buffered']
    #allocation11 [shape = 'u8[16384]{0}', space=vmem, size = 0x4000, scoped, tag = 'output window, operand 0']
    #allocation12 [shape = 'u8[16384]{0}', space=vmem, size = 0x4000, scoped, tag = 'output window, operand 1']
    #allocation13 [shape = 's32[2]{0}', space=sflag, size = 0x8, scoped, tag = 'scoped memory for tpu_custom_call.1']
    %15 = vsyncpa [#allocation3], 0
    %s16 = scalar_lea.sflag [#allocation3], 1
    %17 = vsyncpa %s16, 0
    %18 = vsyncpa [#allocation6], 0
    %s19 = scalar_lea.sflag [#allocation6], 1
    %20 = vsyncpa %s19, 0
    %21 = vsyncpa [#allocation9], 0
    %22 = vsyncpa [#allocation4], 0
    %s23 = scalar_lea.sflag [#allocation4], 1
    %24 = vsyncpa %s23, 0
    %25 = vsyncpa [#allocation13], 0
    %s26 = scalar_lea.sflag [#allocation13], 1
    %27 = vsyncpa %s26, 0
    loop: start=0, step=1, limit=4
    $region2: #{tpu_custom_call.1} parent=1 // loop_pre_header
      _
    $region3: #{tpu_custom_call.1} parent=1 // loop_header
      %s29 = sphi 0, %s33
      %p30 = scmp.ge.s32.totalorder %s29, 4
      %s39 = sphi 0, %s41
      %s42 = sphi 0, %s39
      %s43 = sphi 0, %s42
      %s59 = sphi 0, %s43
      %s65 = sphi 0, %s67
      %s68 = sphi 0, %s65
      %s69 = sphi 0, %s68
      %s85 = sphi 0, %s69
      %s89 = sphi 0, %s89
      %s91 = sphi 0, %s89
      %s92 = sphi 0, %s91
      %s106 = sphi 0, %s92
      %s110 = sphi 0, %s110
      %s112 = sphi 0, %s110
      %s113 = sphi 0, %s112
      %s127 = sphi 0, %s113
      %s131 = sphi 0, %s131
      %s133 = sphi 0, %s131
      %s134 = sphi 0, %s133
      %s148 = sphi 0, %s134
      %s152 = sphi 0, %s152
      %s154 = sphi 0, %s152
      %s155 = sphi 0, %s154
      %s169 = sphi 0, %s155
      %s173 = sphi 0, %s173
      %s175 = sphi 0, %s173
      %s176 = sphi 0, %s175
      %s190 = sphi 0, %s176
      %s194 = sphi 0, %s194
      %s196 = sphi 0, %s194
      %s197 = sphi 0, %s196
      %s211 = sphi 0, %s197
      %s217 = sphi 0, %s219
      %s220 = sphi 0, %s217
      %s221 = sphi 0, %s220
      %s237 = sphi 0, %s221
      %s243 = sphi 0, %s245
      %s246 = sphi 0, %s243
      %s247 = sphi 0, %s246
      %s263 = sphi 0, %s247
    $region4: #{tpu_custom_call.1} parent=1 // loop_header_branch
      %32 = sbr.rel (%p30) target = $region8
    $region5: #{tpu_custom_call.1} parent=1 // loop_body
      %s34 = ssub.s32 %s29, 1
      %s35 = ssub.s32 %s29, 2
      %s36 = sadd.s32 %s29, 1
      %s37 = ssub.s32 %s29, %s36
      %p38 = scmp.eq.s32.totalorder %s37, 0
      %s40 = sadd.s32 %s39, 1
      %s41 = scalar_select %p38, %s39, %s40
      %p44 = pneg %p38
      %p45 = scmp.eq.s32.totalorder %s29, 1
      %p46 = por %p44, %p45
      %p47 = scmp.ne.s32.totalorder %s39, %s42
      %p48 = scmp.eq.s32.totalorder %s29, 0
      %p49 = por %p47, %p48
      %p50 = scmp.ne.s32.totalorder %s39, %s42
      %p51 = scmp.eq.s32.totalorder %s34, 1
      %p52 = por %p50, %p51
      %p53 = scmp.ne.s32.totalorder %s42, %s43
      %p54 = scmp.eq.s32.totalorder %s34, 0
      %p55 = por %p53, %p54
      %p56 = scmp.ne.s32.totalorder %s42, %s43
      %p57 = scmp.eq.s32.totalorder %s35, 1
      %p58 = por %p56, %p57
      %p60 = scmp.ne.s32.totalorder %s43, %s59
      %p61 = scmp.eq.s32.totalorder %s35, 0
      %p62 = por %p60, %p61
      %s63 = ssub.s32 %s29, %s36
      %p64 = scmp.eq.s32.totalorder %s63, 0
      %s66 = sadd.s32 %s65, 1
      %s67 = scalar_select %p64, %s65, %s66
      %p70 = pneg %p64
      %p71 = scmp.eq.s32.totalorder %s29, 1
      %p72 = por %p70, %p71
      %p73 = scmp.ne.s32.totalorder %s65, %s68
      %p74 = scmp.eq.s32.totalorder %s29, 0
      %p75 = por %p73, %p74
      %p76 = scmp.ne.s32.totalorder %s65, %s68
      %p77 = scmp.eq.s32.totalorder %s34, 1
      %p78 = por %p76, %p77
      %p79 = scmp.ne.s32.totalorder %s68, %s69
      %p80 = scmp.eq.s32.totalorder %s34, 0
      %p81 = por %p79, %p80
      %p82 = scmp.ne.s32.totalorder %s68, %s69
      %p83 = scmp.eq.s32.totalorder %s35, 1
      %p84 = por %p82, %p83
      %p86 = scmp.ne.s32.totalorder %s69, %s85
      %p87 = scmp.eq.s32.totalorder %s35, 0
      %p88 = por %p86, %p87
      %s90 = sadd.s32 %s89, 1
      %p93 = scmp.eq.s32.totalorder %s29, 1
      %p94 = scmp.ne.s32.totalorder %s89, %s91
      %p95 = scmp.eq.s32.totalorder %s29, 0
      %p96 = por %p94, %p95
      %p97 = scmp.ne.s32.totalorder %s89, %s91
      %p98 = scmp.eq.s32.totalorder %s34, 1
      %p99 = por %p97, %p98
      %p100 = scmp.ne.s32.totalorder %s91, %s92
      %p101 = scmp.eq.s32.totalorder %s34, 0
      %p102 = por %p100, %p101
      %p103 = scmp.ne.s32.totalorder %s91, %s92
      %p104 = scmp.eq.s32.totalorder %s35, 1
      %p105 = por %p103, %p104
      %p107 = scmp.ne.s32.totalorder %s92, %s106
      %p108 = scmp.eq.s32.totalorder %s35, 0
      %p109 = por %p107, %p108
      %s111 = sadd.s32 %s110, 1
      %p114 = scmp.eq.s32.totalorder %s29, 1
      %p115 = scmp.ne.s32.totalorder %s110, %s112
      %p116 = scmp.eq.s32.totalorder %s29, 0
      %p117 = por %p115, %p116
      %p118 = scmp.ne.s32.totalorder %s110, %s112
      %p119 = scmp.eq.s32.totalorder %s34, 1
      %p120 = por %p118, %p119
      %p121 = scmp.ne.s32.totalorder %s112, %s113
      %p122 = scmp.eq.s32.totalorder %s34, 0
      %p123 = por %p121, %p122
      %p124 = scmp.ne.s32.totalorder %s112, %s113
      %p125 = scmp.eq.s32.totalorder %s35, 1
      %p126 = por %p124, %p125
      %p128 = scmp.ne.s32.totalorder %s113, %s127
      %p129 = scmp.eq.s32.totalorder %s35, 0
      %p130 = por %p128, %p129
      %s132 = sadd.s32 %s131, 1
      %p135 = scmp.eq.s32.totalorder %s29, 1
      %p136 = scmp.ne.s32.totalorder %s131, %s133
      %p137 = scmp.eq.s32.totalorder %s29, 0
      %p138 = por %p136, %p137
      %p139 = scmp.ne.s32.totalorder %s131, %s133
      %p140 = scmp.eq.s32.totalorder %s34, 1
      %p141 = por %p139, %p140
      %p142 = scmp.ne.s32.totalorder %s133, %s134
      %p143 = scmp.eq.s32.totalorder %s34, 0
      %p144 = por %p142, %p143
      %p145 = scmp.ne.s32.totalorder %s133, %s134
      %p146 = scmp.eq.s32.totalorder %s35, 1
      %p147 = por %p145, %p146
      %p149 = scmp.ne.s32.totalorder %s134, %s148
      %p150 = scmp.eq.s32.totalorder %s35, 0
      %p151 = por %p149, %p150
      %s153 = sadd.s32 %s152, 1
      %p156 = scmp.eq.s32.totalorder %s29, 1
      %p157 = scmp.ne.s32.totalorder %s152, %s154
      %p158 = scmp.eq.s32.totalorder %s29, 0
      %p159 = por %p157, %p158
      %p160 = scmp.ne.s32.totalorder %s152, %s154
      %p161 = scmp.eq.s32.totalorder %s34, 1
      %p162 = por %p160, %p161
      %p163 = scmp.ne.s32.totalorder %s154, %s155
      %p164 = scmp.eq.s32.totalorder %s34, 0
      %p165 = por %p163, %p164
      %p166 = scmp.ne.s32.totalorder %s154, %s155
      %p167 = scmp.eq.s32.totalorder %s35, 1
      %p168 = por %p166, %p167
      %p170 = scmp.ne.s32.totalorder %s155, %s169
      %p171 = scmp.eq.s32.totalorder %s35, 0
      %p172 = por %p170, %p171
      %s174 = sadd.s32 %s173, 1
      %p177 = scmp.eq.s32.totalorder %s29, 1
      %p178 = scmp.ne.s32.totalorder %s173, %s175
      %p179 = scmp.eq.s32.totalorder %s29, 0
      %p180 = por %p178, %p179
      %p181 = scmp.ne.s32.totalorder %s173, %s175
      %p182 = scmp.eq.s32.totalorder %s34, 1
      %p183 = por %p181, %p182
      %p184 = scmp.ne.s32.totalorder %s175, %s176
      %p185 = scmp.eq.s32.totalorder %s34, 0
      %p186 = por %p184, %p185
      %p187 = scmp.ne.s32.totalorder %s175, %s176
      %p188 = scmp.eq.s32.totalorder %s35, 1
      %p189 = por %p187, %p188
      %p191 = scmp.ne.s32.totalorder %s176, %s190
      %p192 = scmp.eq.s32.totalorder %s35, 0
      %p193 = por %p191, %p192
      %s195 = sadd.s32 %s194, 1
      %p198 = scmp.eq.s32.totalorder %s29, 1
      %p199 = scmp.ne.s32.totalorder %s194, %s196
      %p200 = scmp.eq.s32.totalorder %s29, 0
      %p201 = por %p199, %p200
      %p202 = scmp.ne.s32.totalorder %s194, %s196
      %p203 = scmp.eq.s32.totalorder %s34, 1
      %p204 = por %p202, %p203
      %p205 = scmp.ne.s32.totalorder %s196, %s197
      %p206 = scmp.eq.s32.totalorder %s34, 0
      %p207 = por %p205, %p206
      %p208 = scmp.ne.s32.totalorder %s196, %s197
      %p209 = scmp.eq.s32.totalorder %s35, 1
      %p210 = por %p208, %p209
      %p212 = scmp.ne.s32.totalorder %s197, %s211
      %p213 = scmp.eq.s32.totalorder %s35, 0
      %p214 = por %p212, %p213
      %s215 = ssub.s32 %s29, %s36
      %p216 = scmp.eq.s32.totalorder %s215, 0
      %s218 = sadd.s32 %s217, 1
      %s219 = scalar_select %p216, %s217, %s218
      %p222 = pneg %p216
      %p223 = scmp.eq.s32.totalorder %s29, 1
      %p224 = por %p222, %p223
      %p225 = scmp.ne.s32.totalorder %s217, %s220
      %p226 = scmp.eq.s32.totalorder %s29, 0
      %p227 = por %p225, %p226
      %p228 = scmp.ne.s32.totalorder %s217, %s220
      %p229 = scmp.eq.s32.totalorder %s34, 1
      %p230 = por %p228, %p229
      %p231 = scmp.ne.s32.totalorder %s220, %s221
      %p232 = scmp.eq.s32.totalorder %s34, 0
      %p233 = por %p231, %p232
      %p234 = scmp.ne.s32.totalorder %s220, %s221
      %p235 = scmp.eq.s32.totalorder %s35, 1
      %p236 = por %p234, %p235
      %p238 = scmp.ne.s32.totalorder %s221, %s237
      %p239 = scmp.eq.s32.totalorder %s35, 0
      %p240 = por %p238, %p239
      %s241 = ssub.s32 %s29, %s36
      %p242 = scmp.eq.s32.totalorder %s241, 0
      %s244 = sadd.s32 %s243, 1
      %s245 = scalar_select %p242, %s243, %s244
      %p248 = pneg %p242
      %p249 = scmp.eq.s32.totalorder %s29, 1
      %p250 = por %p248, %p249
      %p251 = scmp.ne.s32.totalorder %s243, %s246
      %p252 = scmp.eq.s32.totalorder %s29, 0
      %p253 = por %p251, %p252
      %p254 = scmp.ne.s32.totalorder %s243, %s246
      %p255 = scmp.eq.s32.totalorder %s34, 1
      %p256 = por %p254, %p255
      %p257 = scmp.ne.s32.totalorder %s246, %s247
      %p258 = scmp.eq.s32.totalorder %s34, 0
      %p259 = por %p257, %p258
      %p260 = scmp.ne.s32.totalorder %s246, %s247
      %p261 = scmp.eq.s32.totalorder %s35, 1
      %p262 = por %p260, %p261
      %p264 = scmp.ne.s32.totalorder %s247, %s263
      %p265 = scmp.eq.s32.totalorder %s35, 0
      %p266 = por %p264, %p265
      %p267 = scmp.le.s32.totalorder 1, %s29
      %p268 = scmp.lt.s32.totalorder %s29, 3
      %p269 = pnand %p267, %p268
      %p270 = pneg %p269
      // Predicated region
      $region9: #{tpu_custom_call.1} parent=5 // pred_check
        _
      $region10: #{tpu_custom_call.1} parent=5 // pred_check_branch
        %272 = sbr.rel (%p269) target = $region12
      $region11: #{tpu_custom_call.1} parent=5 // pred_region
        %s273 = ssub.s32 %s29, 1
        // Predicated region
        $region13: #{tpu_custom_call.1} parent=11 // pred_check
          %p274 = pneg %p102
        $region14: #{tpu_custom_call.1} parent=11 // pred_check_branch
          %276 = sbr.rel (%p274) target = $region16
        $region15: #{tpu_custom_call.1} parent=11 // pred_region
          %s278 = ssub.s32 1024, 1024
          %279 = vsyncadd [#allocation6], %s278
          %s280 = sshll.u32 [#allocation7], 4
          %s281 = int_to_ptr.vmem [resolvable:$true] %s280
          %286 = dma.hbm_to_vmem [thread:$0]  %s2, 1024, %s281, [#allocation6], 64, 64, 4
        $region16: #{tpu_custom_call.1} parent=11 // pred_fallthru
          _
        // Predicated region
        $region17: #{tpu_custom_call.1} parent=11 // pred_check
          %p287 = pneg %p123
        $region18: #{tpu_custom_call.1} parent=11 // pred_check_branch
          %289 = sbr.rel (%p287) target = $region20
        $region19: #{tpu_custom_call.1} parent=11 // pred_region
          _
        $region20: #{tpu_custom_call.1} parent=11 // pred_fallthru
          _
        // Predicated region
        $region21: #{tpu_custom_call.1} parent=11 // pred_check
          %p290 = pneg %p144
        $region22: #{tpu_custom_call.1} parent=11 // pred_check_branch
          %292 = sbr.rel (%p290) target = $region24
        $region23: #{tpu_custom_call.1} parent=11 // pred_region
          %s294 = ssub.s32 1024, 1024
          %295 = vsyncadd [#allocation9], %s294
          %s296 = sshll.u32 [#allocation8], 4
          %s297 = int_to_ptr.vmem [resolvable:$true] %s296
          %302 = dma.hbm_to_vmem [thread:$0]  %s4, 1024, %s297, [#allocation9], 64, 64, 4
        $region24: #{tpu_custom_call.1} parent=11 // pred_fallthru
          _
        // Predicated region
        $region25: #{tpu_custom_call.1} parent=11 // pred_check
          %p303 = pneg %p165
        $region26: #{tpu_custom_call.1} parent=11 // pred_check_branch
          %305 = sbr.rel (%p303) target = $region28
        $region27: #{tpu_custom_call.1} parent=11 // pred_region
          _
        $region28: #{tpu_custom_call.1} parent=11 // pred_fallthru
          _
        // Predicated region
        $region29: #{tpu_custom_call.1} parent=11 // pred_check
          %p306 = pneg %p186
        $region30: #{tpu_custom_call.1} parent=11 // pred_check_branch
          %308 = sbr.rel (%p306) target = $region32
        $region31: #{tpu_custom_call.1} parent=11 // pred_region
          %s310 = ssub.s32 3072, 3072
          %311 = vsyncadd [#allocation9], %s310
          %s312 = sshll.u32 [#allocation10], 4
          %s313 = int_to_ptr.vmem [resolvable:$true] %s312
          %318 = dma.hbm_to_vmem [thread:$0]  %s6, 3072, %s313, [#allocation9], 64, 64, 4
        $region32: #{tpu_custom_call.1} parent=11 // pred_fallthru
          _
        // Predicated region
        $region33: #{tpu_custom_call.1} parent=11 // pred_check
          %p319 = pneg %p207
        $region34: #{tpu_custom_call.1} parent=11 // pred_check_branch
          %321 = sbr.rel (%p319) target = $region36
        $region35: #{tpu_custom_call.1} parent=11 // pred_region
          _
        $region36: #{tpu_custom_call.1} parent=11 // pred_fallthru
          _
      $region12: #{tpu_custom_call.1} parent=5 // pred_fallthru
        _
      %p322 = scmp.lt.s32.totalorder %s29, 2
      // Predicated region
      $region37: #{tpu_custom_call.1} parent=5 // pred_check
        %p323 = pneg %p322
      $region38: #{tpu_custom_call.1} parent=5 // pred_check_branch
        %325 = sbr.rel (%p323) target = $region40
      $region39: #{tpu_custom_call.1} parent=5 // pred_region
        // Predicated region
        $region41: #{tpu_custom_call.1} parent=39 // pred_check
          %p326 = pneg %p49
        $region42: #{tpu_custom_call.1} parent=39 // pred_check_branch
          %328 = sbr.rel (%p326) target = $region44
        $region43: #{tpu_custom_call.1} parent=39 // pred_region
          %s329 = sand.u32 %s39, 1
          %s330 = scalar_lea.sflag [#allocation3], %s329
          %s331 = sand.u32 %s39, 1
          %s332 = smul.addr %s331, 16
          %s333 = scalar_lea.vmem [#allocation2], %s332
          %s335 = ssub.s32 256, 256
          %336 = vsyncadd %s330, %s335
          %s337 = smul.addr %s29, 2
          %s338 = smul.addr %s337, 128
          %s339 = scalar_lea.hbm %s0, %s338
          %s340 = sshll.u32 %s333, 4
          %s341 = int_to_ptr.vmem [resolvable:$true] %s340
          %346 = dma.hbm_to_vmem [thread:$0]  %s339, 256, %s341, %s330, 128, 128, 8
        $region44: #{tpu_custom_call.1} parent=39 // pred_fallthru
          _
        // Predicated region
        $region45: #{tpu_custom_call.1} parent=39 // pred_check
          %p347 = pneg %p75
        $region46: #{tpu_custom_call.1} parent=39 // pred_check_branch
          %349 = sbr.rel (%p347) target = $region48
        $region47: #{tpu_custom_call.1} parent=39 // pred_region
          %s350 = sand.u32 %s29, 1
          %s351 = scalar_lea.sflag [#allocation6], %s350
          %s352 = sand.u32 %s65, 1
          %s353 = smul.addr %s352, 24
          %s354 = scalar_lea.vmem [#allocation5], %s353
          %s356 = ssub.s32 384, 384
          %357 = vsyncadd %s351, %s356
          %s358 = smul.addr %s29, 3
          %s359 = smul.addr %s358, 128
          %s360 = scalar_lea.hbm %s1, %s359
          %s361 = sshll.u32 %s354, 4
          %s362 = int_to_ptr.vmem [resolvable:$true] %s361
          %367 = dma.hbm_to_vmem [thread:$0]  %s360, 384, %s362, %s351, 128, 128, 8
        $region48: #{tpu_custom_call.1} parent=39 // pred_fallthru
          _
      $region40: #{tpu_custom_call.1} parent=5 // pred_fallthru
        _
      %p368 = scmp.le.s32.totalorder 1, %s29
      %p369 = scmp.lt.s32.totalorder %s29, 3
      %p370 = pnand %p368, %p369
      %p371 = pneg %p370
      // Predicated region
      $region49: #{tpu_custom_call.1} parent=5 // pred_check
        _
      $region50: #{tpu_custom_call.1} parent=5 // pred_check_branch
        %373 = sbr.rel (%p370) target = $region52
      $region51: #{tpu_custom_call.1} parent=5 // pred_region
        %s374 = ssub.s32 %s29, 1
        %s375 = sand.u32 %s42, 1
        %s376 = scalar_lea.sflag [#allocation3], %s375
        %s377 = sand.u32 %s42, 1
        %s378 = smul.addr %s377, 16
        %s379 = scalar_lea.vmem [#allocation2], %s378
        // Predicated region
        $region53: #{tpu_custom_call.1} parent=51 // pred_check
          %p380 = pneg %p55
        $region54: #{tpu_custom_call.1} parent=51 // pred_check_branch
          %382 = sbr.rel (%p380) target = $region56
        $region55: #{tpu_custom_call.1} parent=51 // pred_region
          %383 = dma.done %s376, 256
        $region56: #{tpu_custom_call.1} parent=51 // pred_fallthru
          _
        %s384 = sand.u32 %s34, 1
        %s385 = scalar_lea.sflag [#allocation6], %s384
        %s386 = sand.u32 %s68, 1
        %s387 = smul.addr %s386, 24
        %s388 = scalar_lea.vmem [#allocation5], %s387
        // Predicated region
        $region57: #{tpu_custom_call.1} parent=51 // pred_check
          %p389 = pneg %p81
        $region58: #{tpu_custom_call.1} parent=51 // pred_check_branch
          %391 = sbr.rel (%p389) target = $region60
        $region59: #{tpu_custom_call.1} parent=51 // pred_region
          %392 = dma.done %s385, 384
        $region60: #{tpu_custom_call.1} parent=51 // pred_fallthru
          _
        // Predicated region
        $region61: #{tpu_custom_call.1} parent=51 // pred_check
          %p393 = pneg %p102
        $region62: #{tpu_custom_call.1} parent=51 // pred_check_branch
          %395 = sbr.rel (%p393) target = $region64
        $region63: #{tpu_custom_call.1} parent=51 // pred_region
          %396 = dma.done [#allocation6], 1024
        $region64: #{tpu_custom_call.1} parent=51 // pred_fallthru
          _
        // Predicated region
        $region65: #{tpu_custom_call.1} parent=51 // pred_check
          %p397 = pneg %p144
        $region66: #{tpu_custom_call.1} parent=51 // pred_check_branch
          %399 = sbr.rel (%p397) target = $region68
        $region67: #{tpu_custom_call.1} parent=51 // pred_region
          %400 = dma.done [#allocation9], 1024
        $region68: #{tpu_custom_call.1} parent=51 // pred_fallthru
          _
        // Predicated region
        $region69: #{tpu_custom_call.1} parent=51 // pred_check
          %p401 = pneg %p186
        $region70: #{tpu_custom_call.1} parent=51 // pred_check_branch
          %403 = sbr.rel (%p401) target = $region72
        $region71: #{tpu_custom_call.1} parent=51 // pred_region
          %404 = dma.done [#allocation9], 3072
        $region72: #{tpu_custom_call.1} parent=51 // pred_fallthru
          _
        %s405 = sand.u32 %s42, 1
        %s406 = scalar_lea.sflag [#allocation3], %s405
        %s407 = sand.u32 %s42, 1
        %s408 = smul.addr %s407, 16
        %s409 = scalar_lea.vmem [#allocation2], %s408
        %p410 = pneg %p55
        %p411 = pneg %p52
        %s412 = sand.u32 %s34, 1
        %s413 = scalar_lea.sflag [#allocation6], %s412
        %s414 = sand.u32 %s68, 1
        %s415 = smul.addr %s414, 24
        %s416 = scalar_lea.vmem [#allocation5], %s415
        %p417 = pneg %p81
        %p418 = pneg %p78
        %p419 = pneg %p102
        %p420 = pneg %p99
        %p421 = pneg %p123
        %p422 = pneg %p120
        %p423 = pneg %p144
        %p424 = pneg %p141
        %p425 = pneg %p165
        %p426 = pneg %p162
        %p427 = pneg %p186
        %p428 = pneg %p183
        %p429 = pneg %p207
        %p430 = pneg %p204
        %p431 = pneg %p233
        %p432 = pneg %p230
        %s433 = sand.u32 %s220, 1
        %s434 = scalar_lea.sflag [#allocation4], %s433
        %s435 = sand.u32 %s220, 1
        %s436 = smul.addr %s435, 16
        %s437 = scalar_lea.vmem [#allocation11], %s436
        %p438 = pneg %p259
        %p439 = pneg %p256
        %s440 = sand.u32 %s246, 1
        %s441 = scalar_lea.sflag [#allocation13], %s440
        %s442 = sand.u32 %s246, 1
        %s443 = smul.addr %s442, 16
        %s444 = scalar_lea.vmem [#allocation12], %s443
        %v446 = vld [vmem:[%s379] sm:$0xff]
        %v447 = vld [vmem:[%s379 + $0x8] sm:$0xff]
        %v448 = vld [vmem:[%s388] sm:$0xff]
        %v449 = vld [vmem:[%s388 + $0x8] sm:$0xff]
        %v450 = vld [vmem:[%s388 + $0x10] sm:$0xff]
        %v451 = vlaneseq
        %v452 = vshrl.u32 %v451, 7
        %v453 = vadd.s32 %v452, 8
        %vm454 = vcmp.lt.s32.totalorder %v452, 0
        %v455 = vsub.s32 0, %v452
        %v456 = vsel %vm454, %v455, %v452
        %v457 = vshrl.u32 %v456, 4
        %v458 = vand.u32 %v456, 15
        %v459 = vsub.s32 0, %v458
        %v460 = vsel %vm454, %v459, %v458
        %vm461 = vcmp.lt.s32.totalorder %v453, 0
        %v462 = vsub.s32 0, %v453
        %v463 = vsel %vm461, %v462, %v453
        %v464 = vshrl.u32 %v463, 4
        %v465 = vand.u32 %v463, 15
        %v466 = vsub.s32 0, %v465
        %v467 = vsel %vm461, %v466, %v465
        %vm468 = vcmp.ne.s32.totalorder %v460, 0
        %vm469 = vcmp.ne.s32.totalorder %v467, 0
        %vm470 = vcmp.lt.s32.totalorder %v460, 0
        %vm471 = vcmp.lt.s32.totalorder %v467, 0
        %vm472 = vmand %vm470, %vm468
        %vm473 = vmand %vm471, %vm469
        %v474 = vadd.s32 %v460, 16
        %v475 = vadd.s32 %v467, 16
        %v476 = vsel %vm472, %v474, %v460
        %v477 = vsel %vm473, %v475, %v467
        %v478 = vadd.s32 %v476, 1
        %v479 = vadd.s32 %v477, 1
        %vm480 = vcmp.lt.s32.totalorder %v478, 16
        %vm481 = vcmp.lt.s32.totalorder %v479, 16
        %v482 = vadd.s32 %v476, 2
        %v483 = vadd.s32 %v477, 2
        %vm484 = vcmp.lt.s32.totalorder %v482, 16
        %vm485 = vcmp.lt.s32.totalorder %v483, 16
        %v486 = vsub.s32 %v476, 1
        %v487 = vsub.s32 %v477, 1
        %vm488 = vcmp.ge.s32.totalorder %v486, 0
        %vm489 = vcmp.ge.s32.totalorder %v487, 0
        %v490 = vsub.s32 %v476, 2
        %v491 = vsub.s32 %v477, 2
        %vm492 = vcmp.ge.s32.totalorder %v490, 0
        %vm493 = vcmp.ge.s32.totalorder %v491, 0
        %v494 = vmul.f32 %v446, 0.088388346
        %v495 = vmul.f32 %v447, 0.088388346
        %v496 = vpack.c.bf16 %v495, %v494
        %v497 = vpack.c.bf16 %v447, %v446
        %498 = vmatprep.subr.bf16.mxu0 0
        %499 = vmatpush1.bf16.xpose.msra.mxu0 %v497
        %500 = vmatprep.subr.bf16.mxu0 0
        %501 = vmatpush1.bf16.xpose.msra.mxu0 0
        %502 = vmatprep.subr.bf16.mxu0 0
        %503 = vmatpush1.bf16.xpose.msra.mxu0 0
        %504 = vmatprep.subr.bf16.mxu0 0
        %505 = vmatpush1.bf16.xpose.msra.mxu0 0
        %506 = vmatprep.subr.bf16.mxu0 0
        %507 = vmatpush1.bf16.xpose.msra.mxu0 0
        %508 = vmatprep.subr.bf16.mxu0 0
        %509 = vmatpush1.bf16.xpose.msra.mxu0 0
        %510 = vmatprep.subr.bf16.mxu0 0
        %511 = vmatpush1.bf16.xpose.msra.mxu0 0
        %512 = vmatprep.subr.bf16.mxu0 0
        %513 = vmatpush1.bf16.xpose.msra.mxu0 0
        %514 = vmatprep.subr.bf16.mxu0 0
        %515 = vmatpush1.bf16.xpose.msra.mxu0 0
        %516 = vmatprep.subr.bf16.mxu0 0
        %517 = vmatpush1.bf16.xpose.msra.mxu0 0
        %518 = vmatprep.subr.bf16.mxu0 0
        %519 = vmatpush1.bf16.xpose.msra.mxu0 0
        %520 = vmatprep.subr.bf16.mxu0 0
        %521 = vmatpush1.bf16.xpose.msra.mxu0 0
        %522 = vmatprep.subr.bf16.mxu0 0
        %523 = vmatpush1.bf16.xpose.msra.mxu0 0
        %524 = vmatprep.subr.bf16.mxu0 0
        %525 = vmatpush1.bf16.xpose.msra.mxu0 0
        %526 = vmatprep.subr.bf16.mxu0 0
        %527 = vmatpush1.bf16.xpose.msra.mxu0 0
        %528 = vmatprep.subr.bf16.mxu0 0
        %529 = vmatpush1.bf16.xpose.msra.mxu0 0
        %530 = vmatprep.mubr.bf16.mxu0 0
        %531 = vmatmul.mubr.bf16.gmra.mrb[0].mxu0 %v496
        %v532 = vpop.f32.mrb[0].mxu0
        %v533 = vadd.f32 0.0, %v532
        %v534 = vpop.f32.mrb[0].mxu0
        %v535 = vpop.f32.mrb[0].mxu0
        %v536 = vadd.f32 0.0, %v535
        %v537 = vpop.f32.mrb[0].mxu0
        %538 = vdwg.mxu0
        %vm539 = vcmask 130048
        %v540 = vsel %vm539, %v533, -inf
        %541 = vmax.xlane.f32.xlu0 %v540
        %v542 = vpop.xlane.xlu0 %541
        %v543 = vsel %vm539, %v536, -inf
        %544 = vmax.xlane.f32.xlu0 %v543
        %v545 = vpop.xlane.xlu0 %544
        %v546 = vsub.f32 %v533, %v542
        %v547 = vsub.f32 %v536, %v545
        %v548 = vmul.f32 %v546, 1.442695
        %v549 = vpow.pop %v548
        %v550 = vmul.f32 %v547, 1.442695
        %v551 = vpow.pop %v550
        %v552 = vsel %vm539, %v549, 0.0
        %553 = vadd.xlane.f32.xlu0 %v552
        %v554 = vpop.xlane.xlu0 %553
        %v555 = vsel %vm539, %v551, 0.0
        %556 = vadd.xlane.f32.xlu0 %v555
        %v557 = vpop.xlane.xlu0 %556
        %v558 = vpack.c.bf16 %v551, %v549
        %v560 = vsel %vm539, %v558, 0
        %562 = vmatprep.subr.bf16.mxu0 0
        %563 = vmatpush1.bf16.msra.mxu0 %v497
        %564 = vmatprep.subr.bf16.mxu0 0
        %565 = vmatpush1.bf16.msra.mxu0 0
        %566 = vmatprep.subr.bf16.mxu0 0
        %567 = vmatpush1.bf16.msra.mxu0 0
        %568 = vmatprep.subr.bf16.mxu0 0
        %569 = vmatpush1.bf16.msra.mxu0 0
        %570 = vmatprep.subr.bf16.mxu0 0
        %571 = vmatpush1.bf16.msra.mxu0 0
        %572 = vmatprep.subr.bf16.mxu0 0
        %573 = vmatpush1.bf16.msra.mxu0 0
        %574 = vmatprep.subr.bf16.mxu0 0
        %575 = vmatpush1.bf16.msra.mxu0 0
        %576 = vmatprep.subr.bf16.mxu0 0
        %577 = vmatpush1.bf16.msra.mxu0 0
        %578 = vmatprep.subr.bf16.mxu0 0
        %579 = vmatpush1.bf16.msra.mxu0 0
        %580 = vmatprep.subr.bf16.mxu0 0
        %581 = vmatpush1.bf16.msra.mxu0 0
        %582 = vmatprep.subr.bf16.mxu0 0
        %583 = vmatpush1.bf16.msra.mxu0 0
        %584 = vmatprep.subr.bf16.mxu0 0
        %585 = vmatpush1.bf16.msra.mxu0 0
        %586 = vmatprep.subr.bf16.mxu0 0
        %587 = vmatpush1.bf16.msra.mxu0 0
        %588 = vmatprep.subr.bf16.mxu0 0
        %589 = vmatpush1.bf16.msra.mxu0 0
        %590 = vmatprep.subr.bf16.mxu0 0
        %591 = vmatpush1.bf16.msra.mxu0 0
        %592 = vmatprep.subr.bf16.mxu0 0
        %593 = vmatpush1.bf16.msra.mxu0 0
        %594 = vmatprep.mubr.bf16.mxu0 0
        %595 = vmatmul.mubr.bf16.gmra.mrb[0].mxu0 %v560
        %v596 = vpop.f32.mrb[0].mxu0
        %v597 = vadd.f32 0.0, %v596
        %v598 = vpop.f32.mrb[0].mxu0
        %v599 = vpop.f32.mrb[0].mxu0
        %v600 = vadd.f32 0.0, %v599
        %v601 = vpop.f32.mrb[0].mxu0
        %602 = vdwg.mxu0
        %v603 = vrcp.pop %v554
        %v604 = vrcp.pop %v557
        %v605 = vmul.f32 %v597, %v603
        %v606 = vmul.f32 %v600, %v604
        %v607 = vadd.f32 %v446, %v605
        %v608 = vadd.f32 %v447, %v606
        %v609 = vrot.slane %v607, 1
        %v610 = vrot.slane %v608, 1
        %vm611 = vcmp.lt.s32.totalorder %v452, 7
        %v612 = vsel %vm611, %v609, %v610
        %v613 = vsel %vm611, %v610, %v609
        %v614 = vrot.slane %v607, 7
        %v615 = vrot.slane %v608, 7
        %vm616 = vcmp.lt.s32.totalorder %v452, 1
        %v617 = vsel %vm616, %v614, %v615
        %v618 = vsel %vm616, %v615, %v614
        %v619 = vsel %vm480, 1, 0
        %v620 = vsel %vm481, 1, 0
        %vm621 = vcmp.eq.s32.totalorder %v619, 1
        %vm622 = vcmp.eq.s32.totalorder %v620, 1
        %v623 = vsel %vm621, %v612, 0.0
        %v624 = vsel %vm622, %v613, 0.0
        %v625 = vadd.f32 %v607, %v623
        %v626 = vadd.f32 %v608, %v624
        %v627 = vsel %vm488, 1, 0
        %v628 = vsel %vm489, 1, 0
        %vm629 = vcmp.eq.s32.totalorder %v627, 1
        %vm630 = vcmp.eq.s32.totalorder %v628, 1
        %v631 = vsel %vm629, %v618, 0.0
        %v632 = vsel %vm630, %v617, 0.0
        %v633 = vadd.f32 %v625, %v631
        %v634 = vadd.f32 %v626, %v632
        %v635 = vrot.slane %v607, 2
        %v636 = vrot.slane %v608, 2
        %vm637 = vcmp.lt.s32.totalorder %v452, 6
        %v638 = vsel %vm637, %v635, %v636
        %v639 = vsel %vm637, %v636, %v635
        %v640 = vrot.slane %v607, 6
        %v641 = vrot.slane %v608, 6
        %vm642 = vcmp.lt.s32.totalorder %v452, 2
        %v643 = vsel %vm642, %v640, %v641
        %v644 = vsel %vm642, %v641, %v640
        %v645 = vsel %vm484, 1, 0
        %v646 = vsel %vm485, 1, 0
        %vm647 = vcmp.eq.s32.totalorder %v645, 1
        %vm648 = vcmp.eq.s32.totalorder %v646, 1
        %v649 = vsel %vm647, %v638, 0.0
        %v650 = vsel %vm648, %v639, 0.0
        %v651 = vadd.f32 %v633, %v649
        %v652 = vadd.f32 %v634, %v650
        %v653 = vsel %vm492, 1, 0
        %v654 = vsel %vm493, 1, 0
        %vm655 = vcmp.eq.s32.totalorder %v653, 1
        %vm656 = vcmp.eq.s32.totalorder %v654, 1
        %v657 = vsel %vm655, %v644, 0.0
        %v658 = vsel %vm656, %v643, 0.0
        %v659 = vadd.f32 %v651, %v657
        %v660 = vadd.f32 %v652, %v658
        %v661 = vmul.f32 %v659, 0.2
        %v662 = vmul.f32 %v660, 0.2
        %v663 = vsub.f32 %v607, %v661
        %v664 = vsub.f32 %v608, %v662
        %v665 = vmul.f32 %v663, 0.088388346
        %v666 = vmul.f32 %v664, 0.088388346
        %v667 = vpack.c.bf16 %v666, %v665
        %v668 = vpack.c.bf16 %v449, %v448
        %v669 = vpack.c.bf16 %v450, %v450
        %670 = vmatprep.subr.bf16.mxu0 0
        %671 = vmatpush1.bf16.xpose.msra.mxu0 %v668
        %672 = vmatprep.subr.bf16.mxu0 0
        %673 = vmatpush1.bf16.xpose.msra.mxu0 %v669
        %674 = vmatprep.subr.bf16.mxu0 0
        %675 = vmatpush1.bf16.xpose.msra.mxu0 0
        %676 = vmatprep.subr.bf16.mxu0 0
        %677 = vmatpush1.bf16.xpose.msra.mxu0 0
        %678 = vmatprep.subr.bf16.mxu0 0
        %679 = vmatpush1.bf16.xpose.msra.mxu0 0
        %680 = vmatprep.subr.bf16.mxu0 0
        %681 = vmatpush1.bf16.xpose.msra.mxu0 0
        %682 = vmatprep.subr.bf16.mxu0 0
        %683 = vmatpush1.bf16.xpose.msra.mxu0 0
        %684 = vmatprep.subr.bf16.mxu0 0
        %685 = vmatpush1.bf16.xpose.msra.mxu0 0
        %686 = vmatprep.subr.bf16.mxu0 0
        %687 = vmatpush1.bf16.xpose.msra.mxu0 0
        %688 = vmatprep.subr.bf16.mxu0 0
        %689 = vmatpush1.bf16.xpose.msra.mxu0 0
        %690 = vmatprep.subr.bf16.mxu0 0
        %691 = vmatpush1.bf16.xpose.msra.mxu0 0
        %692 = vmatprep.subr.bf16.mxu0 0
        %693 = vmatpush1.bf16.xpose.msra.mxu0 0
        %694 = vmatprep.subr.bf16.mxu0 0
        %695 = vmatpush1.bf16.xpose.msra.mxu0 0
        %696 = vmatprep.subr.bf16.mxu0 0
        %697 = vmatpush1.bf16.xpose.msra.mxu0 0
        %698 = vmatprep.subr.bf16.mxu0 0
        %699 = vmatpush1.bf16.xpose.msra.mxu0 0
        %700 = vmatprep.subr.bf16.mxu0 0
        %701 = vmatpush1.bf16.xpose.msra.mxu0 0
        %702 = vmatprep.mubr.bf16.mxu0 0
        %703 = vmatmul.mubr.bf16.gmra.mrb[0].mxu0 %v667
        %v704 = vpop.f32.mrb[0].mxu0
        %v705 = vadd.f32 0.0, %v704
        %v706 = vpop.f32.mrb[0].mxu0
        %v707 = vpop.f32.mrb[0].mxu0
        %v708 = vadd.f32 0.0, %v707
        %v709 = vpop.f32.mrb[0].mxu0
        %710 = vdwg.mxu0
        %vm711 = vcmask 195584
        %v712 = vsel %vm711, %v705, -inf
        %713 = vmax.xlane.f32.xlu0 %v712
        %v714 = vpop.xlane.xlu0 %713
        %v715 = vsel %vm711, %v708, -inf
        %716 = vmax.xlane.f32.xlu0 %v715
        %v717 = vpop.xlane.xlu0 %716
        %v718 = vsub.f32 %v705, %v714
        %v719 = vsub.f32 %v708, %v717
        %v720 = vmul.f32 %v718, 1.442695
        %v721 = vpow.pop %v720
        %v722 = vmul.f32 %v719, 1.442695
        %v723 = vpow.pop %v722
        %v724 = vsel %vm711, %v721, 0.0
        %725 = vadd.xlane.f32.xlu0 %v724
        %v726 = vpop.xlane.xlu0 %725
        %v727 = vsel %vm711, %v723, 0.0
        %728 = vadd.xlane.f32.xlu0 %v727
        %v729 = vpop.xlane.xlu0 %728
        %v730 = vpack.c.bf16 %v723, %v721
        %v732 = vsel %vm711, %v730, 0
        %vm734 = vcmask 1043456
        %v736 = vsel %vm734, %v669, 0
        %738 = vmatprep.subr.bf16.mxu0 0
        %739 = vmatpush1.bf16.msra.mxu0 %v668
        %740 = vmatprep.subr.bf16.mxu0 0
        %741 = vmatpush1.bf16.msra.mxu0 %v736
        %742 = vmatprep.subr.bf16.mxu0 0
        %743 = vmatpush1.bf16.msra.mxu0 0
        %744 = vmatprep.subr.bf16.mxu0 0
        %745 = vmatpush1.bf16.msra.mxu0 0
        %746 = vmatprep.subr.bf16.mxu0 0
        %747 = vmatpush1.bf16.msra.mxu0 0
        %748 = vmatprep.subr.bf16.mxu0 0
        %749 = vmatpush1.bf16.msra.mxu0 0
        %750 = vmatprep.subr.bf16.mxu0 0
        %751 = vmatpush1.bf16.msra.mxu0 0
        %752 = vmatprep.subr.bf16.mxu0 0
        %753 = vmatpush1.bf16.msra.mxu0 0
        %754 = vmatprep.subr.bf16.mxu0 0
        %755 = vmatpush1.bf16.msra.mxu0 0
        %756 = vmatprep.subr.bf16.mxu0 0
        %757 = vmatpush1.bf16.msra.mxu0 0
        %758 = vmatprep.subr.bf16.mxu0 0
        %759 = vmatpush1.bf16.msra.mxu0 0
        %760 = vmatprep.subr.bf16.mxu0 0
        %761 = vmatpush1.bf16.msra.mxu0 0
        %762 = vmatprep.subr.bf16.mxu0 0
        %763 = vmatpush1.bf16.msra.mxu0 0
        %764 = vmatprep.subr.bf16.mxu0 0
        %765 = vmatpush1.bf16.msra.mxu0 0
        %766 = vmatprep.subr.bf16.mxu0 0
        %767 = vmatpush1.bf16.msra.mxu0 0
        %768 = vmatprep.subr.bf16.mxu0 0
        %769 = vmatpush1.bf16.msra.mxu0 0
        %770 = vmatprep.mubr.bf16.mxu0 0
        %771 = vmatmul.mubr.bf16.gmra.mrb[0].mxu0 %v732
        %v772 = vpop.f32.mrb[0].mxu0
        %v773 = vadd.f32 0.0, %v772
        %v774 = vpop.f32.mrb[0].mxu0
        %v775 = vpop.f32.mrb[0].mxu0
        %v776 = vadd.f32 0.0, %v775
        %v777 = vpop.f32.mrb[0].mxu0
        %778 = vdwg.mxu0
        %v779 = vrcp.pop %v726
        %v780 = vrcp.pop %v729
        %v781 = vmul.f32 %v773, %v779
        %v782 = vmul.f32 %v776, %v780
        %v783 = vadd.f32 %v663, %v781
        %v784 = vadd.f32 %v664, %v782
        %v785 = vrot.slane %v783, 1
        %v786 = vrot.slane %v784, 1
        %v787 = vsel %vm611, %v785, %v786
        %v788 = vsel %vm611, %v786, %v785
        %v789 = vrot.slane %v783, 7
        %v790 = vrot.slane %v784, 7
        %v791 = vsel %vm616, %v789, %v790
        %v792 = vsel %vm616, %v790, %v789
        %v793 = vsel %vm621, %v787, 0.0
        %v794 = vsel %vm622, %v788, 0.0
        %v795 = vadd.f32 %v783, %v793
        %v796 = vadd.f32 %v784, %v794
        %v797 = vsel %vm629, %v792, 0.0
        %v798 = vsel %vm630, %v791, 0.0
        %v799 = vadd.f32 %v795, %v797
        %v800 = vadd.f32 %v796, %v798
        %v801 = vrot.slane %v783, 2
        %v802 = vrot.slane %v784, 2
        %v803 = vsel %vm637, %v801, %v802
        %v804 = vsel %vm637, %v802, %v801
        %v805 = vrot.slane %v783, 6
        %v806 = vrot.slane %v784, 6
        %v807 = vsel %vm642, %v805, %v806
        %v808 = vsel %vm642, %v806, %v805
        %v809 = vsel %vm647, %v803, 0.0
        %v810 = vsel %vm648, %v804, 0.0
        %v811 = vadd.f32 %v799, %v809
        %v812 = vadd.f32 %v800, %v810
        %v813 = vsel %vm655, %v808, 0.0
        %v814 = vsel %vm656, %v807, 0.0
        %v815 = vadd.f32 %v811, %v813
        %v816 = vadd.f32 %v812, %v814
        %v817 = vmul.f32 %v815, 0.2
        %v818 = vmul.f32 %v816, 0.2
        %v819 = vsub.f32 %v783, %v817
        %v820 = vsub.f32 %v784, %v818
        %v821 = vpack.c.bf16 %v820, %v819
        %v822 = vld [vmem:[#allocation7] sm:$0xf]
        %v823 = vld [vmem:[#allocation7 + $0x4] sm:$0xf]
        %v824 = vld [vmem:[#allocation7 + $0x8] sm:$0xf]
        %v825 = vld [vmem:[#allocation7 + $0xc] sm:$0xf]
        %v826 = vld [vmem:[#allocation7 + $0x10] sm:$0xf]
        %v827 = vld [vmem:[#allocation7 + $0x14] sm:$0xf]
        %v828 = vld [vmem:[#allocation7 + $0x18] sm:$0xf]
        %v829 = vld [vmem:[#allocation7 + $0x1c] sm:$0xf]
        %v830 = vld [vmem:[#allocation7 + $0x20] sm:$0xf]
        %v831 = vld [vmem:[#allocation7 + $0x24] sm:$0xf]
        %v832 = vld [vmem:[#allocation7 + $0x28] sm:$0xf]
        %v833 = vld [vmem:[#allocation7 + $0x2c] sm:$0xf]
        %v834 = vld [vmem:[#allocation7 + $0x30] sm:$0xf]
        %v835 = vld [vmem:[#allocation7 + $0x34] sm:$0xf]
        %v836 = vld [vmem:[#allocation7 + $0x38] sm:$0xf]
        %v837 = vld [vmem:[#allocation7 + $0x3c] sm:$0xf]
        %v838 = vld [vmem:[%s3] sm:$0x1]
        %v840 = vlaneseq
        %v841 = vshrl.u32 %v840, 7
        %v842 = vsub.s32 0, %v841
        %v843 = vrot.slane %v838, %v842
        %v861 = vunpack.c.l.b16 %v822
        %v862 = vunpack.c.l.b16 %v823
        %v863 = vunpack.c.l.b16 %v824
        %v864 = vunpack.c.l.b16 %v825
        %v865 = vunpack.c.l.b16 %v826
        %v866 = vunpack.c.l.b16 %v827
        %v867 = vunpack.c.l.b16 %v828
        %v868 = vunpack.c.l.b16 %v829
        %v869 = vunpack.c.l.b16 %v830
        %v870 = vunpack.c.l.b16 %v831
        %v871 = vunpack.c.l.b16 %v832
        %v872 = vunpack.c.l.b16 %v833
        %v873 = vunpack.c.l.b16 %v834
        %v874 = vunpack.c.l.b16 %v835
        %v875 = vunpack.c.l.b16 %v836
        %v876 = vunpack.c.l.b16 %v837
        %v877 = vpack.c.b16 %v862, %v861
        %v878 = vpack.c.b16 %v864, %v863
        %v879 = vpack.c.b16 %v866, %v865
        %v880 = vpack.c.b16 %v868, %v867
        %v881 = vpack.c.b16 %v870, %v869
        %v882 = vpack.c.b16 %v872, %v871
        %v883 = vpack.c.b16 %v874, %v873
        %v884 = vpack.c.b16 %v876, %v875
        %893 = vmatprep.subr.bf16.mxu0 0
        %894 = vmatpush1.bf16.msra.mxu0 %v877
        %895 = vmatprep.subr.bf16.mxu0 0
        %896 = vmatpush1.bf16.msra.mxu0 %v878
        %897 = vmatprep.subr.bf16.mxu0 0
        %898 = vmatpush1.bf16.msra.mxu0 %v879
        %899 = vmatprep.subr.bf16.mxu0 0
        %900 = vmatpush1.bf16.msra.mxu0 %v880
        %901 = vmatprep.subr.bf16.mxu0 0
        %902 = vmatpush1.bf16.msra.mxu0 %v881
        %903 = vmatprep.subr.bf16.mxu0 0
        %904 = vmatpush1.bf16.msra.mxu0 %v882
        %905 = vmatprep.subr.bf16.mxu0 0
        %906 = vmatpush1.bf16.msra.mxu0 %v883
        %907 = vmatprep.subr.bf16.mxu0 0
        %908 = vmatpush1.bf16.msra.mxu0 %v884
        %909 = vmatprep.subr.bf16.mxu0 0
        %910 = vmatpush1.bf16.msra.mxu0 0
        %911 = vmatprep.subr.bf16.mxu0 0
        %912 = vmatpush1.bf16.msra.mxu0 0
        %913 = vmatprep.subr.bf16.mxu0 0
        %914 = vmatpush1.bf16.msra.mxu0 0
        %915 = vmatprep.subr.bf16.mxu0 0
        %916 = vmatpush1.bf16.msra.mxu0 0
        %917 = vmatprep.subr.bf16.mxu0 0
        %918 = vmatpush1.bf16.msra.mxu0 0
        %919 = vmatprep.subr.bf16.mxu0 0
        %920 = vmatpush1.bf16.msra.mxu0 0
        %921 = vmatprep.subr.bf16.mxu0 0
        %922 = vmatpush1.bf16.msra.mxu0 0
        %923 = vmatprep.subr.bf16.mxu0 0
        %924 = vmatpush1.bf16.msra.mxu0 0
        %925 = vmatprep.mubr.bf16.mxu0 0
        %926 = vmatmul.mubr.bf16.gmra.mrb[0].mxu0 %v821
        %v927 = vpop.f32.mrb[0].mxu0
        %v928 = vadd.f32 %v843, %v927
        %v929 = vpop.f32.mrb[0].mxu0
        %v930 = vpop.f32.mrb[0].mxu0
        %v931 = vadd.f32 %v843, %v930
        %v932 = vpop.f32.mrb[0].mxu0
        %933 = vdwg.mxu0
        %v934 = vmax.f32 %v928, 0.0
        %v935 = vmax.f32 %v931, 0.0
        %v936 = vpack.c.bf16 %v935, %v934
        %v937 = vld [vmem:[#allocation8] sm:$0xf]
        %v938 = vld [vmem:[#allocation8 + $0x4] sm:$0xf]
        %v939 = vld [vmem:[#allocation8 + $0x8] sm:$0xf]
        %v940 = vld [vmem:[#allocation8 + $0xc] sm:$0xf]
        %v941 = vld [vmem:[#allocation8 + $0x10] sm:$0xf]
        %v942 = vld [vmem:[#allocation8 + $0x14] sm:$0xf]
        %v943 = vld [vmem:[#allocation8 + $0x18] sm:$0xf]
        %v944 = vld [vmem:[#allocation8 + $0x1c] sm:$0xf]
        %v945 = vld [vmem:[#allocation8 + $0x20] sm:$0xf]
        %v946 = vld [vmem:[#allocation8 + $0x24] sm:$0xf]
        %v947 = vld [vmem:[#allocation8 + $0x28] sm:$0xf]
        %v948 = vld [vmem:[#allocation8 + $0x2c] sm:$0xf]
        %v949 = vld [vmem:[#allocation8 + $0x30] sm:$0xf]
        %v950 = vld [vmem:[#allocation8 + $0x34] sm:$0xf]
        %v951 = vld [vmem:[#allocation8 + $0x38] sm:$0xf]
        %v952 = vld [vmem:[#allocation8 + $0x3c] sm:$0xf]
        %v953 = vld [vmem:[%s5] sm:$0x1]
        %v955 = vlaneseq
        %v956 = vshrl.u32 %v955, 7
        %v957 = vsub.s32 0, %v956
        %v958 = vrot.slane %v953, %v957
        %v976 = vunpack.c.l.b16 %v937
        %v977 = vunpack.c.l.b16 %v938
        %v978 = vunpack.c.l.b16 %v939
        %v979 = vunpack.c.l.b16 %v940
        %v980 = vunpack.c.l.b16 %v941
        %v981 = vunpack.c.l.b16 %v942
        %v982 = vunpack.c.l.b16 %v943
        %v983 = vunpack.c.l.b16 %v944
        %v984 = vunpack.c.l.b16 %v945
        %v985 = vunpack.c.l.b16 %v946
        %v986 = vunpack.c.l.b16 %v947
        %v987 = vunpack.c.l.b16 %v948
        %v988 = vunpack.c.l.b16 %v949
        %v989 = vunpack.c.l.b16 %v950
        %v990 = vunpack.c.l.b16 %v951
        %v991 = vunpack.c.l.b16 %v952
        %v992 = vpack.c.b16 %v977, %v976
        %v993 = vpack.c.b16 %v979, %v978
        %v994 = vpack.c.b16 %v981, %v980
        %v995 = vpack.c.b16 %v983, %v982
        %v996 = vpack.c.b16 %v985, %v984
        %v997 = vpack.c.b16 %v987, %v986
        %v998 = vpack.c.b16 %v989, %v988
        %v999 = vpack.c.b16 %v991, %v990
        %1008 = vmatprep.subr.bf16.mxu0 0
        %1009 = vmatpush1.bf16.msra.mxu0 %v992
        %1010 = vmatprep.subr.bf16.mxu0 0
        %1011 = vmatpush1.bf16.msra.mxu0 %v993
        %1012 = vmatprep.subr.bf16.mxu0 0
        %1013 = vmatpush1.bf16.msra.mxu0 %v994
        %1014 = vmatprep.subr.bf16.mxu0 0
        %1015 = vmatpush1.bf16.msra.mxu0 %v995
        %1016 = vmatprep.subr.bf16.mxu0 0
        %1017 = vmatpush1.bf16.msra.mxu0 %v996
        %1018 = vmatprep.subr.bf16.mxu0 0
        %1019 = vmatpush1.bf16.msra.mxu0 %v997
        %1020 = vmatprep.subr.bf16.mxu0 0
        %1021 = vmatpush1.bf16.msra.mxu0 %v998
        %1022 = vmatprep.subr.bf16.mxu0 0
        %1023 = vmatpush1.bf16.msra.mxu0 %v999
        %1024 = vmatprep.subr.bf16.mxu0 0
        %1025 = vmatpush1.bf16.msra.mxu0 0
        %1026 = vmatprep.subr.bf16.mxu0 0
        %1027 = vmatpush1.bf16.msra.mxu0 0
        %1028 = vmatprep.subr.bf16.mxu0 0
        %1029 = vmatpush1.bf16.msra.mxu0 0
        %1030 = vmatprep.subr.bf16.mxu0 0
        %1031 = vmatpush1.bf16.msra.mxu0 0
        %1032 = vmatprep.subr.bf16.mxu0 0
        %1033 = vmatpush1.bf16.msra.mxu0 0
        %1034 = vmatprep.subr.bf16.mxu0 0
        %1035 = vmatpush1.bf16.msra.mxu0 0
        %1036 = vmatprep.subr.bf16.mxu0 0
        %1037 = vmatpush1.bf16.msra.mxu0 0
        %1038 = vmatprep.subr.bf16.mxu0 0
        %1039 = vmatpush1.bf16.msra.mxu0 0
        %1040 = vmatprep.mubr.bf16.mxu0 0
        %1041 = vmatmul.mubr.bf16.gmra.mrb[0].mxu0 %v936
        %v1042 = vpop.f32.mrb[0].mxu0
        %v1043 = vadd.f32 %v958, %v1042
        %v1044 = vpop.f32.mrb[0].mxu0
        %v1045 = vpop.f32.mrb[0].mxu0
        %v1046 = vadd.f32 %v958, %v1045
        %v1047 = vpop.f32.mrb[0].mxu0
        %1048 = vdwg.mxu0
        %v1049 = vadd.f32 %v819, %v1043
        %v1050 = vadd.f32 %v820, %v1046
        %v1051 = vrot.slane %v1049, 1
        %v1052 = vrot.slane %v1050, 1
        %v1053 = vsel %vm611, %v1051, %v1052
        %v1054 = vsel %vm611, %v1052, %v1051
        %v1055 = vrot.slane %v1049, 7
        %v1056 = vrot.slane %v1050, 7
        %v1057 = vsel %vm616, %v1055, %v1056
        %v1058 = vsel %vm616, %v1056, %v1055
        %v1059 = vsel %vm621, %v1053, 0.0
        %v1060 = vsel %vm622, %v1054, 0.0
        %v1061 = vadd.f32 %v1049, %v1059
        %v1062 = vadd.f32 %v1050, %v1060
        %v1063 = vsel %vm629, %v1058, 0.0
        %v1064 = vsel %vm630, %v1057, 0.0
        %v1065 = vadd.f32 %v1061, %v1063
        %v1066 = vadd.f32 %v1062, %v1064
        %v1067 = vrot.slane %v1049, 2
        %v1068 = vrot.slane %v1050, 2
        %v1069 = vsel %vm637, %v1067, %v1068
        %v1070 = vsel %vm637, %v1068, %v1067
        %v1071 = vrot.slane %v1049, 6
        %v1072 = vrot.slane %v1050, 6
        %v1073 = vsel %vm642, %v1071, %v1072
        %v1074 = vsel %vm642, %v1072, %v1071
        %v1075 = vsel %vm647, %v1069, 0.0
        %v1076 = vsel %vm648, %v1070, 0.0
        %v1077 = vadd.f32 %v1065, %v1075
        %v1078 = vadd.f32 %v1066, %v1076
        %v1079 = vsel %vm655, %v1074, 0.0
        %v1080 = vsel %vm656, %v1073, 0.0
        %v1081 = vadd.f32 %v1077, %v1079
        %v1082 = vadd.f32 %v1078, %v1080
        %v1083 = vmul.f32 %v1081, 0.2
        %v1084 = vmul.f32 %v1082, 0.2
        %v1085 = vsub.f32 %v1049, %v1083
        %v1086 = vsub.f32 %v1050, %v1084
        %1087 = vst [vmem:[%s437] sm:$0xff] %v1085
        %1088 = vst [vmem:[%s437 + $0x8] sm:$0xff] %v1086
        %v1089 = vadd.f32 %v661, %v817
        %v1090 = vadd.f32 %v662, %v818
        %v1091 = vadd.f32 %v1089, %v1083
        %v1092 = vadd.f32 %v1090, %v1084
        %v1093 = vrot.slane %v1091, 7
        %v1094 = vrot.slane %v1092, 7
        %v1095 = vsel %vm616, %v1093, %v1094
        %v1096 = vsel %vm616, %v1094, %v1093
        %v1097 = vrot.slane %v1091, 1
        %v1098 = vrot.slane %v1092, 1
        %v1099 = vsel %vm611, %v1097, %v1098
        %v1100 = vsel %vm611, %v1098, %v1097
        %v1101 = vpack.c.bf16 %v1095, %v1096
        %v1102 = vpack.c.bf16 %v1092, %v1091
        %v1103 = vpack.c.bf16 %v1100, %v1099
        %v1104 = vld [vmem:[#allocation10] sm:$0xf]
        %v1105 = vld [vmem:[#allocation10 + $0x4] sm:$0xf]
        %v1106 = vld [vmem:[#allocation10 + $0x8] sm:$0xf]
        %v1107 = vld [vmem:[#allocation10 + $0xc] sm:$0xf]
        %v1108 = vld [vmem:[#allocation10 + $0x10] sm:$0xf]
        %v1109 = vld [vmem:[#allocation10 + $0x14] sm:$0xf]
        %v1110 = vld [vmem:[#allocation10 + $0x18] sm:$0xf]
        %v1111 = vld [vmem:[#allocation10 + $0x1c] sm:$0xf]
        %v1112 = vld [vmem:[#allocation10 + $0x20] sm:$0xf]
        %v1113 = vld [vmem:[#allocation10 + $0x24] sm:$0xf]
        %v1114 = vld [vmem:[#allocation10 + $0x28] sm:$0xf]
        %v1115 = vld [vmem:[#allocation10 + $0x2c] sm:$0xf]
        %v1116 = vld [vmem:[#allocation10 + $0x30] sm:$0xf]
        %v1117 = vld [vmem:[#allocation10 + $0x34] sm:$0xf]
        %v1118 = vld [vmem:[#allocation10 + $0x38] sm:$0xf]
        %v1119 = vld [vmem:[#allocation10 + $0x3c] sm:$0xf]
        %v1120 = vld [vmem:[#allocation10 + $0x40] sm:$0xf]
        %v1121 = vld [vmem:[#allocation10 + $0x44] sm:$0xf]
        %v1122 = vld [vmem:[#allocation10 + $0x48] sm:$0xf]
        %v1123 = vld [vmem:[#allocation10 + $0x4c] sm:$0xf]
        %v1124 = vld [vmem:[#allocation10 + $0x50] sm:$0xf]
        %v1125 = vld [vmem:[#allocation10 + $0x54] sm:$0xf]
        %v1126 = vld [vmem:[#allocation10 + $0x58] sm:$0xf]
        %v1127 = vld [vmem:[#allocation10 + $0x5c] sm:$0xf]
        %v1128 = vld [vmem:[#allocation10 + $0x60] sm:$0xf]
        %v1129 = vld [vmem:[#allocation10 + $0x64] sm:$0xf]
        %v1130 = vld [vmem:[#allocation10 + $0x68] sm:$0xf]
        %v1131 = vld [vmem:[#allocation10 + $0x6c] sm:$0xf]
        %v1132 = vld [vmem:[#allocation10 + $0x70] sm:$0xf]
        %v1133 = vld [vmem:[#allocation10 + $0x74] sm:$0xf]
        %v1134 = vld [vmem:[#allocation10 + $0x78] sm:$0xf]
        %v1135 = vld [vmem:[#allocation10 + $0x7c] sm:$0xf]
        %v1136 = vld [vmem:[#allocation10 + $0x80] sm:$0xf]
        %v1137 = vld [vmem:[#allocation10 + $0x84] sm:$0xf]
        %v1138 = vld [vmem:[#allocation10 + $0x88] sm:$0xf]
        %v1139 = vld [vmem:[#allocation10 + $0x8c] sm:$0xf]
        %v1140 = vld [vmem:[#allocation10 + $0x90] sm:$0xf]
        %v1141 = vld [vmem:[#allocation10 + $0x94] sm:$0xf]
        %v1142 = vld [vmem:[#allocation10 + $0x98] sm:$0xf]
        %v1143 = vld [vmem:[#allocation10 + $0x9c] sm:$0xf]
        %v1144 = vld [vmem:[#allocation10 + $0xa0] sm:$0xf]
        %v1145 = vld [vmem:[#allocation10 + $0xa4] sm:$0xf]
        %v1146 = vld [vmem:[#allocation10 + $0xa8] sm:$0xf]
        %v1147 = vld [vmem:[#allocation10 + $0xac] sm:$0xf]
        %v1148 = vld [vmem:[#allocation10 + $0xb0] sm:$0xf]
        %v1149 = vld [vmem:[#allocation10 + $0xb4] sm:$0xf]
        %v1150 = vld [vmem:[#allocation10 + $0xb8] sm:$0xf]
        %v1151 = vld [vmem:[#allocation10 + $0xbc] sm:$0xf]
        %v1152 = vld [vmem:[%s7] sm:$0x1]
        %v1154 = vlaneseq
        %v1155 = vshrl.u32 %v1154, 7
        %v1156 = vsub.s32 0, %v1155
        %v1157 = vrot.slane %v1152, %v1156
        %v1207 = vunpack.c.l.b16 %v1104
        %v1208 = vunpack.c.l.b16 %v1105
        %v1209 = vunpack.c.l.b16 %v1106
        %v1210 = vunpack.c.l.b16 %v1107
        %v1211 = vunpack.c.l.b16 %v1108
        %v1212 = vunpack.c.l.b16 %v1109
        %v1213 = vunpack.c.l.b16 %v1110
        %v1214 = vunpack.c.l.b16 %v1111
        %v1215 = vunpack.c.l.b16 %v1112
        %v1216 = vunpack.c.l.b16 %v1113
        %v1217 = vunpack.c.l.b16 %v1114
        %v1218 = vunpack.c.l.b16 %v1115
        %v1219 = vunpack.c.l.b16 %v1116
        %v1220 = vunpack.c.l.b16 %v1117
        %v1221 = vunpack.c.l.b16 %v1118
        %v1222 = vunpack.c.l.b16 %v1119
        %v1223 = vunpack.c.l.b16 %v1120
        %v1224 = vunpack.c.l.b16 %v1121
        %v1225 = vunpack.c.l.b16 %v1122
        %v1226 = vunpack.c.l.b16 %v1123
        %v1227 = vunpack.c.l.b16 %v1124
        %v1228 = vunpack.c.l.b16 %v1125
        %v1229 = vunpack.c.l.b16 %v1126
        %v1230 = vunpack.c.l.b16 %v1127
        %v1231 = vunpack.c.l.b16 %v1128
        %v1232 = vunpack.c.l.b16 %v1129
        %v1233 = vunpack.c.l.b16 %v1130
        %v1234 = vunpack.c.l.b16 %v1131
        %v1235 = vunpack.c.l.b16 %v1132
        %v1236 = vunpack.c.l.b16 %v1133
        %v1237 = vunpack.c.l.b16 %v1134
        %v1238 = vunpack.c.l.b16 %v1135
        %v1239 = vunpack.c.l.b16 %v1136
        %v1240 = vunpack.c.l.b16 %v1137
        %v1241 = vunpack.c.l.b16 %v1138
        %v1242 = vunpack.c.l.b16 %v1139
        %v1243 = vunpack.c.l.b16 %v1140
        %v1244 = vunpack.c.l.b16 %v1141
        %v1245 = vunpack.c.l.b16 %v1142
        %v1246 = vunpack.c.l.b16 %v1143
        %v1247 = vunpack.c.l.b16 %v1144
        %v1248 = vunpack.c.l.b16 %v1145
        %v1249 = vunpack.c.l.b16 %v1146
        %v1250 = vunpack.c.l.b16 %v1147
        %v1251 = vunpack.c.l.b16 %v1148
        %v1252 = vunpack.c.l.b16 %v1149
        %v1253 = vunpack.c.l.b16 %v1150
        %v1254 = vunpack.c.l.b16 %v1151
        %v1255 = vpack.c.b16 %v1208, %v1207
        %v1256 = vpack.c.b16 %v1210, %v1209
        %v1257 = vpack.c.b16 %v1212, %v1211
        %v1258 = vpack.c.b16 %v1214, %v1213
        %v1259 = vpack.c.b16 %v1216, %v1215
        %v1260 = vpack.c.b16 %v1218, %v1217
        %v1261 = vpack.c.b16 %v1220, %v1219
        %v1262 = vpack.c.b16 %v1222, %v1221
        %v1263 = vpack.c.b16 %v1224, %v1223
        %v1264 = vpack.c.b16 %v1226, %v1225
        %v1265 = vpack.c.b16 %v1228, %v1227
        %v1266 = vpack.c.b16 %v1230, %v1229
        %v1267 = vpack.c.b16 %v1232, %v1231
        %v1268 = vpack.c.b16 %v1234, %v1233
        %v1269 = vpack.c.b16 %v1236, %v1235
        %v1270 = vpack.c.b16 %v1238, %v1237
        %v1271 = vpack.c.b16 %v1240, %v1239
        %v1272 = vpack.c.b16 %v1242, %v1241
        %v1273 = vpack.c.b16 %v1244, %v1243
        %v1274 = vpack.c.b16 %v1246, %v1245
        %v1275 = vpack.c.b16 %v1248, %v1247
        %v1276 = vpack.c.b16 %v1250, %v1249
        %v1277 = vpack.c.b16 %v1252, %v1251
        %v1278 = vpack.c.b16 %v1254, %v1253
        %1303 = vmatprep.subr.bf16.mxu0 0
        %1304 = vmatpush1.bf16.msra.mxu0 %v1255
        %1305 = vmatprep.subr.bf16.mxu0 0
        %1306 = vmatpush1.bf16.msra.mxu0 %v1256
        %1307 = vmatprep.subr.bf16.mxu0 0
        %1308 = vmatpush1.bf16.msra.mxu0 %v1257
        %1309 = vmatprep.subr.bf16.mxu0 0
        %1310 = vmatpush1.bf16.msra.mxu0 %v1258
        %1311 = vmatprep.subr.bf16.mxu0 0
        %1312 = vmatpush1.bf16.msra.mxu0 %v1259
        %1313 = vmatprep.subr.bf16.mxu0 0
        %1314 = vmatpush1.bf16.msra.mxu0 %v1260
        %1315 = vmatprep.subr.bf16.mxu0 0
        %1316 = vmatpush1.bf16.msra.mxu0 %v1261
        %1317 = vmatprep.subr.bf16.mxu0 0
        %1318 = vmatpush1.bf16.msra.mxu0 %v1262
        %1319 = vmatprep.subr.bf16.mxu0 0
        %1320 = vmatpush1.bf16.msra.mxu0 %v1263
        %1321 = vmatprep.subr.bf16.mxu0 0
        %1322 = vmatpush1.bf16.msra.mxu0 %v1264
        %1323 = vmatprep.subr.bf16.mxu0 0
        %1324 = vmatpush1.bf16.msra.mxu0 %v1265
        %1325 = vmatprep.subr.bf16.mxu0 0
        %1326 = vmatpush1.bf16.msra.mxu0 %v1266
        %1327 = vmatprep.subr.bf16.mxu0 0
        %1328 = vmatpush1.bf16.msra.mxu0 %v1267
        %1329 = vmatprep.subr.bf16.mxu0 0
        %1330 = vmatpush1.bf16.msra.mxu0 %v1268
        %1331 = vmatprep.subr.bf16.mxu0 0
        %1332 = vmatpush1.bf16.msra.mxu0 %v1269
        %1333 = vmatprep.subr.bf16.mxu0 0
        %1334 = vmatpush1.bf16.msra.mxu0 %v1270
        %1335 = vmatprep.mubr.bf16.mxu0 %v1102
        %1336 = vmatmul.mubr.bf16.gmra.mrb[0].mxu0 %v1101
        %v1337 = vpop.f32.mrb[0].mxu0
        %v1338 = vadd.f32 %v1157, %v1337
        %v1339 = vpop.f32.mrb[0].mxu0
        %v1340 = vpop.f32.mrb[0].mxu0
        %v1341 = vadd.f32 %v1157, %v1340
        %v1342 = vpop.f32.mrb[0].mxu0
        %1343 = vdwg.mxu0
        %1344 = vmatprep.subr.bf16.mxu0 0
        %1345 = vmatpush1.bf16.msra.mxu0 %v1271
        %1346 = vmatprep.subr.bf16.mxu0 0
        %1347 = vmatpush1.bf16.msra.mxu0 %v1272
        %1348 = vmatprep.subr.bf16.mxu0 0
        %1349 = vmatpush1.bf16.msra.mxu0 %v1273
        %1350 = vmatprep.subr.bf16.mxu0 0
        %1351 = vmatpush1.bf16.msra.mxu0 %v1274
        %1352 = vmatprep.subr.bf16.mxu0 0
        %1353 = vmatpush1.bf16.msra.mxu0 %v1275
        %1354 = vmatprep.subr.bf16.mxu0 0
        %1355 = vmatpush1.bf16.msra.mxu0 %v1276
        %1356 = vmatprep.subr.bf16.mxu0 0
        %1357 = vmatpush1.bf16.msra.mxu0 %v1277
        %1358 = vmatprep.subr.bf16.mxu0 0
        %1359 = vmatpush1.bf16.msra.mxu0 %v1278
        %1360 = vmatprep.subr.bf16.mxu0 0
        %1361 = vmatpush1.bf16.msra.mxu0 0
        %1362 = vmatprep.subr.bf16.mxu0 0
        %1363 = vmatpush1.bf16.msra.mxu0 0
        %1364 = vmatprep.subr.bf16.mxu0 0
        %1365 = vmatpush1.bf16.msra.mxu0 0
        %1366 = vmatprep.subr.bf16.mxu0 0
        %1367 = vmatpush1.bf16.msra.mxu0 0
        %1368 = vmatprep.subr.bf16.mxu0 0
        %1369 = vmatpush1.bf16.msra.mxu0 0
        %1370 = vmatprep.subr.bf16.mxu0 0
        %1371 = vmatpush1.bf16.msra.mxu0 0
        %1372 = vmatprep.subr.bf16.mxu0 0
        %1373 = vmatpush1.bf16.msra.mxu0 0
        %1374 = vmatprep.subr.bf16.mxu0 0
        %1375 = vmatpush1.bf16.msra.mxu0 0
        %1376 = vmatprep.mubr.bf16.mxu0 0
        %1377 = vmatmul.mubr.bf16.gmra.mrb[0].mxu0 %v1103
        %v1378 = vpop.f32.mrb[0].mxu0
        %v1379 = vadd.f32 %v1338, %v1378
        %v1380 = vpop.f32.mrb[0].mxu0
        %v1381 = vpop.f32.mrb[0].mxu0
        %v1382 = vadd.f32 %v1341, %v1381
        %v1383 = vpop.f32.mrb[0].mxu0
        %1384 = vdwg.mxu0
        %1385 = vst [vmem:[%s444] sm:$0xff] %v1379
        %1386 = vst [vmem:[%s444 + $0x8] sm:$0xff] %v1382
        %s1387 = sand.u32 %s220, 1
        %s1388 = scalar_lea.sflag [#allocation4], %s1387
        %s1389 = sand.u32 %s220, 1
        %s1390 = smul.addr %s1389, 16
        %s1391 = scalar_lea.vmem [#allocation11], %s1390
        %s1392 = sand.u32 %s246, 1
        %s1393 = scalar_lea.sflag [#allocation13], %s1392
        %s1394 = sand.u32 %s246, 1
        %s1395 = smul.addr %s1394, 16
        %s1396 = scalar_lea.vmem [#allocation12], %s1395
        // Predicated region
        $region73: #{tpu_custom_call.1} parent=51 // pred_check
          %p1397 = pneg %p230
        $region74: #{tpu_custom_call.1} parent=51 // pred_check_branch
          %1399 = sbr.rel (%p1397) target = $region76
        $region75: #{tpu_custom_call.1} parent=51 // pred_region
          %s1401 = ssub.s32 256, 256
          %1402 = vsyncadd %s1388, %s1401
          %s1403 = smul.addr %s34, 2
          %s1404 = smul.addr %s1403, 128
          %s1405 = scalar_lea.hbm %s8, %s1404
          %s1406 = sshll.u32 %s1391, 4
          %s1407 = int_to_ptr.vmem [resolvable:$true] %s1406
          %1412 = dma.vmem_to_hbm [thread:$0]  %s1407, 256, %s1405, %s1388, 128, 128, 8
        $region76: #{tpu_custom_call.1} parent=51 // pred_fallthru
          _
        // Predicated region
        $region77: #{tpu_custom_call.1} parent=51 // pred_check
          %p1413 = pneg %p256
        $region78: #{tpu_custom_call.1} parent=51 // pred_check_branch
          %1415 = sbr.rel (%p1413) target = $region80
        $region79: #{tpu_custom_call.1} parent=51 // pred_region
          %s1417 = ssub.s32 256, 256
          %1418 = vsyncadd %s1393, %s1417
          %s1419 = smul.addr %s34, 2
          %s1420 = smul.addr %s1419, 128
          %s1421 = scalar_lea.hbm %s9, %s1420
          %s1422 = sshll.u32 %s1396, 4
          %s1423 = int_to_ptr.vmem [resolvable:$true] %s1422
          %1428 = dma.vmem_to_hbm [thread:$0]  %s1423, 256, %s1421, %s1393, 128, 128, 8
        $region80: #{tpu_custom_call.1} parent=51 // pred_fallthru
          _
      $region52: #{tpu_custom_call.1} parent=5 // pred_fallthru
        _
      %p1429 = scmp.le.s32.totalorder 2, %s29
      // Predicated region
      $region81: #{tpu_custom_call.1} parent=5 // pred_check
        %p1430 = pneg %p1429
      $region82: #{tpu_custom_call.1} parent=5 // pred_check_branch
        %1432 = sbr.rel (%p1430) target = $region84
      $region83: #{tpu_custom_call.1} parent=5 // pred_region
        %s1433 = ssub.s32 %s29, 2
        // Predicated region
        $region85: #{tpu_custom_call.1} parent=83 // pred_check
          %p1434 = pneg %p236
        $region86: #{tpu_custom_call.1} parent=83 // pred_check_branch
          %1436 = sbr.rel (%p1434) target = $region88
        $region87: #{tpu_custom_call.1} parent=83 // pred_region
          %s1437 = sand.u32 %s221, 1
          %s1438 = scalar_lea.sflag [#allocation4], %s1437
          %s1439 = sand.u32 %s221, 1
          %s1440 = smul.addr %s1439, 16
          %s1441 = scalar_lea.vmem [#allocation11], %s1440
          %1442 = dma.done %s1438, 256
        $region88: #{tpu_custom_call.1} parent=83 // pred_fallthru
          _
        // Predicated region
        $region89: #{tpu_custom_call.1} parent=83 // pred_check
          %p1443 = pneg %p262
        $region90: #{tpu_custom_call.1} parent=83 // pred_check_branch
          %1445 = sbr.rel (%p1443) target = $region92
        $region91: #{tpu_custom_call.1} parent=83 // pred_region
          %s1446 = sand.u32 %s247, 1
          %s1447 = scalar_lea.sflag [#allocation13], %s1446
          %s1448 = sand.u32 %s247, 1
          %s1449 = smul.addr %s1448, 16
          %s1450 = scalar_lea.vmem [#allocation12], %s1449
          %1451 = dma.done %s1447, 256
        $region92: #{tpu_custom_call.1} parent=83 // pred_fallthru
          _
      $region84: #{tpu_custom_call.1} parent=5 // pred_fallthru
        _
    $region6: #{tpu_custom_call.1} parent=1 // loop_footer
      %s33 = sadd.s32 1, %s29
    $region7: #{tpu_custom_call.1} parent=1 // loop_footer_branch
      %28 = sbr.rel target = $region3
    $region8: #{tpu_custom_call.1} parent=1 // loop_exit
      _
    %1452 = vsyncpa [#allocation3], 1
    %s1453 = scalar_lea.sflag [#allocation3], 1
    %1454 = vsyncpa %s1453, 1
    %1455 = vsyncpa [#allocation6], 1
    %s1456 = scalar_lea.sflag [#allocation6], 1
    %1457 = vsyncpa %s1456, 1
    %1458 = vsyncpa [#allocation9], 1
    %1459 = vsyncpa [#allocation4], 1
    %s1460 = scalar_lea.sflag [#allocation4], 1
    %1461 = vsyncpa %s1460, 1
    %1462 = vsyncpa [#allocation13], 1
    %s1463 = scalar_lea.sflag [#allocation13], 1
    %1464 = vsyncpa %s1463, 1

</llo_original>
